<compile_context>
chip_gen: v7x
topology: tpu7x:2x2x1
jax: 0.10.0
libtpu: 0.0.40
codegen_flags: <defaults>
</compile_context>

<pallas_src>
import math
import jax
import jax.numpy as jnp
from jax.experimental import pallas as pl
from jax.experimental.pallas import tpu as pltpu

GCN_FEATURE_DIM = 1280
GCN_HIDDEN_DIM = 256
GCN_OUTPUT_DIM = 64
GCN_OUTPUT_PAD = 128      # lane-dense padded width for GC2 / LN2 / output store
LN_EPS = 1e-5
LEAKY_SLOPE = 0.2


def _leaky_relu(x):
    return jnp.where(x >= 0, x, LEAKY_SLOPE * x)


def _round_up(n, m):
    return ((n + m - 1) // m) * m


# ----------------------------------------------------------------------------- kernel
def _gcn_kernel(x_ref, adj_ref,
                w1_ref, b1_ref, g1_ref, be1_ref,
                w2_ref, b2_ref, g2_ref, be2_ref,
                out_ref, s1_ref, s2_ref):
    """Grid = (B, phase, row_tile).

    x_ref   : (TM, 1280)  bf16   row tile of node features (phase 0 only)
    adj_ref : (TM, Npad)  bf16   row tile of adjacency (phases 1, 2)
    s1_ref  : (Npad, 256) bf16   persistent scratch: x @ W1
    s2_ref  : (Npad, 128) bf16   persistent scratch: act(LN1(agg1)) @ W2p
    out_ref : (TM, 128)   bf16   row tile of output (phase 2)
    """
    ph = pl.program_id(1)
    rt = pl.program_id(2)
    tm = x_ref.shape[0]
    row0 = pl.multiple_of(rt * tm, tm)

    # ---- phase 0: support1 rows = x_rows @ W1 (bf16 MXU, f32 accumulate) ----
    @pl.when(ph == 0)
    def _():
        s1 = jnp.dot(x_ref[...], w1_ref[...], preferred_element_type=jnp.float32)
        s1_ref[pl.ds(row0, tm), :] = s1.astype(jnp.bfloat16)

    # ---- phase 1: agg1 rows -> LN1 -> LeakyReLU -> support2 rows ----
    @pl.when(ph == 1)
    def _():
        h1 = jnp.dot(adj_ref[...], s1_ref[...],
                     preferred_element_type=jnp.float32) + b1_ref[...]
        mu = jnp.mean(h1, axis=-1, keepdims=True)
        var = jnp.mean((h1 - mu) ** 2, axis=-1, keepdims=True)
        h1 = (h1 - mu) * jax.lax.rsqrt(var + LN_EPS) * g1_ref[...] + be1_ref[...]
        h1 = _leaky_relu(h1)
        s2 = jnp.dot(h1.astype(jnp.bfloat16), w2_ref[...],
                     preferred_element_type=jnp.float32)
        s2_ref[pl.ds(row0, tm), :] = s2.astype(jnp.bfloat16)

    # ---- phase 2: agg2 rows -> LN2 (over real 64 lanes) -> LeakyReLU -> store ----
    @pl.when(ph == 2)
    def _():
        h2 = jnp.dot(adj_ref[...], s2_ref[...],
                     preferred_element_type=jnp.float32) + b2_ref[...]
        # Lanes 64..127 of h2 are exactly 0 (w2/b2 pad columns are zero).
        lane = jax.lax.broadcasted_iota(jnp.int32, h2.shape, h2.ndim - 1)
        valid = lane < GCN_OUTPUT_DIM
        mu = jnp.sum(h2, axis=-1, keepdims=True) * (1.0 / GCN_OUTPUT_DIM)
        centered = jnp.where(valid, h2 - mu, 0.0)
        var = jnp.sum(centered * centered, axis=-1, keepdims=True) * (1.0 / GCN_OUTPUT_DIM)
        # pad gamma/beta = 0  -> padded lanes write exact 0 (lane-dense unmasked store).
        y = (h2 - mu) * jax.lax.rsqrt(var + LN_EPS) * g2_ref[...] + be2_ref[...]
        out_ref[...] = _leaky_relu(y).astype(out_ref.dtype)


# ----------------------------------------------------------------------------- params
def _prep_params(params):
    """Cast weights to bf16 and pad the GC2 params to 128 lanes (pad = 0)."""
    w2p = jnp.zeros((GCN_HIDDEN_DIM, GCN_OUTPUT_PAD), jnp.float32)
    w2p = w2p.at[:, :GCN_OUTPUT_DIM].set(params["w2"])

    def padvec(v):
        out = jnp.zeros((GCN_OUTPUT_PAD,), jnp.float32)
        return out.at[:GCN_OUTPUT_DIM].set(v).reshape(1, -1)

    return (
        params["w1"].astype(jnp.bfloat16),
        params["b1"].reshape(1, -1).astype(jnp.float32),
        params["g1"].reshape(1, -1).astype(jnp.float32),
        params["be1"].reshape(1, -1).astype(jnp.float32),
        w2p.astype(jnp.bfloat16),
        padvec(params["b2"]),
        padvec(params["g2"]),     # pad gamma = 0 -> padded lanes output exactly 0
        padvec(params["be2"]),    # pad beta  = 0
    )


# ----------------------------------------------------------------------------- sizing
def _vmem_capacity_bytes():
    try:
        return int(pltpu.get_tpu_info().vmem_capacity_bytes)
    except Exception:
        return 64 << 20   # conservative: v7x per-TensorCore VMEM


def _vmem_estimate(tm, npad):
    # double-buffered per-step tiles
    tiles = 2 * (tm * GCN_FEATURE_DIM * 2        # x tile (bf16)
                 + tm * npad * 2                 # adj row tile (bf16)
                 + tm * GCN_OUTPUT_PAD * 2)      # out tile (bf16)
    # resident weights (count x2 for pipeline buffering)
    weights = 2 * (GCN_FEATURE_DIM * GCN_HIDDEN_DIM * 2
                   + GCN_HIDDEN_DIM * GCN_OUTPUT_PAD * 2
                   + 3 * GCN_HIDDEN_DIM * 4 + 3 * GCN_OUTPUT_PAD * 4)
    # persistent support scratch (bf16)
    scratch = npad * (GCN_HIDDEN_DIM + GCN_OUTPUT_PAD) * 2
    # kernel-internal f32 temporaries (h1/h2, LN temps) with margin
    interm = 6 * tm * GCN_HIDDEN_DIM * 4
    return tiles + weights + scratch + interm + (4 << 20)


def _choose_tiling(n, cap):
    tm = 256 if n >= 256 else max(16, _round_up(n, 16))
    while True:
        npad = _round_up(n, tm)
        est = _vmem_estimate(tm, npad)
        if est <= cap or tm <= 16:
            return tm, npad, est
        tm = max(16, tm // 2)


# ----------------------------------------------------------------------------- wrapper
def gcn_forward_batched(x, adj, params):
    """x: (B, N, F), adj: (B, N, N) -> (B, N, 64) float32."""
    B, N, F = x.shape
    assert F == GCN_FEATURE_DIM and adj.shape == (B, N, N)

    cap = int(0.85 * _vmem_capacity_bytes())
    tm, npad, vmem_est = _choose_tiling(N, cap)
    if vmem_est > cap:
        raise ValueError(
            f"GCN kernel: N={N} does not fit VMEM even at TM=16 "
            f"(need ~{vmem_est >> 20} MiB, cap {cap >> 20} MiB).")
    n_tiles = npad // tm

    w1, b1, g1, be1, w2p, b2p, g2p, be2p = _prep_params(params)

    xb = x.astype(jnp.bfloat16)
    ab = adj.astype(jnp.bfloat16)
    if npad != N:
        xb = jnp.pad(xb, ((0, 0), (0, npad - N), (0, 0)))
        ab = jnp.pad(ab, ((0, 0), (0, npad - N), (0, npad - N)))

    # -- index maps (phase-aware; constant index => block stays VMEM-resident) --
    x_map = lambda b, ph, rt: (b, jnp.where(ph == 0, rt, n_tiles - 1), 0)
    adj_map = lambda b, ph, rt: (b, jnp.where(ph == 0, 0, rt), 0)
    out_map = lambda b, ph, rt: (b, jnp.where(ph == 2, rt, 0), 0)
    const_w = lambda b, ph, rt: (0, 0)

    in_specs = [
        pl.BlockSpec((None, tm, GCN_FEATURE_DIM), x_map),        # x rows (phase 0)
        pl.BlockSpec((None, tm, npad), adj_map),                 # adj rows (phases 1,2)
        pl.BlockSpec((GCN_FEATURE_DIM, GCN_HIDDEN_DIM), const_w),   # w1 (resident)
        pl.BlockSpec((1, GCN_HIDDEN_DIM), const_w),                 # b1
        pl.BlockSpec((1, GCN_HIDDEN_DIM), const_w),                 # g1
        pl.BlockSpec((1, GCN_HIDDEN_DIM), const_w),                 # be1
        pl.BlockSpec((GCN_HIDDEN_DIM, GCN_OUTPUT_PAD), const_w),    # w2 padded (resident)
        pl.BlockSpec((1, GCN_OUTPUT_PAD), const_w),                 # b2p
        pl.BlockSpec((1, GCN_OUTPUT_PAD), const_w),                 # g2p
        pl.BlockSpec((1, GCN_OUTPUT_PAD), const_w),                 # be2p
    ]
    out_specs = pl.BlockSpec((None, tm, GCN_OUTPUT_PAD), out_map)

    scratch_shapes = [
        pltpu.VMEM((npad, GCN_HIDDEN_DIM), jnp.bfloat16),   # support1
        pltpu.VMEM((npad, GCN_OUTPUT_PAD), jnp.bfloat16),   # support2 (lane-padded)
    ]

    flops = 2 * B * (npad * GCN_FEATURE_DIM * GCN_HIDDEN_DIM
                     + npad * npad * GCN_HIDDEN_DIM
                     + npad * GCN_HIDDEN_DIM * GCN_OUTPUT_PAD
                     + npad * npad * GCN_OUTPUT_PAD)
    bytes_accessed = (B * (npad * GCN_FEATURE_DIM * 2          # x (bf16)
                           + 2 * npad * npad * 2               # adj streamed twice (bf16)
                           + npad * GCN_OUTPUT_PAD * 2)        # out (bf16)
                      + GCN_FEATURE_DIM * GCN_HIDDEN_DIM * 2
                      + GCN_HIDDEN_DIM * GCN_OUTPUT_PAD * 2)
    cost = pl.CostEstimate(flops=int(flops),
                           transcendentals=int(2 * B * npad),
                           bytes_accessed=int(bytes_accessed))

    vmem_limit = int(min(cap, max(vmem_est, 24 << 20)))

    out_padded = pl.pallas_call(
        _gcn_kernel,
        out_shape=jax.ShapeDtypeStruct((B, npad, GCN_OUTPUT_PAD), jnp.bfloat16),
        grid=(B, 3, n_tiles),
        in_specs=in_specs,
        out_specs=out_specs,
        scratch_shapes=scratch_shapes,
        compiler_params=pltpu.CompilerParams(
            dimension_semantics=("parallel", "arbitrary", "arbitrary"),
            vmem_limit_bytes=vmem_limit,
        ),
        cost_estimate=cost,
    )(xb, ab, w1, b1, g1, be1, w2p, b2p, g2p, be2p)

    return out_padded[:, :N, :GCN_OUTPUT_DIM].astype(jnp.float32)


def gcn_forward(x, adj, params):
    """Single graph (matches the PyTorch module): x (N, F), adj (N, N) -> (N, 64)."""
    return gcn_forward_batched(x[None], adj[None], params)[0]


# ----------------------------------------------------------------------------- init / ref
def init_params(key):
    # Matches GraphConvolution.reset_parameters: uniform(-1/sqrt(out_dim), 1/sqrt(out_dim))
    k1, k2, k3, k4 = jax.random.split(key, 4)
    stdv1 = 1.0 / math.sqrt(GCN_HIDDEN_DIM)
    stdv2 = 1.0 / math.sqrt(GCN_OUTPUT_DIM)
    return {
        "w1": jax.random.uniform(k1, (GCN_FEATURE_DIM, GCN_HIDDEN_DIM),
                                 jnp.float32, -stdv1, stdv1),
        "b1": jax.random.uniform(k2, (GCN_HIDDEN_DIM,), jnp.float32, -stdv1, stdv1),
        "w2": jax.random.uniform(k3, (GCN_HIDDEN_DIM, GCN_OUTPUT_DIM),
                                 jnp.float32, -stdv2, stdv2),
        "b2": jax.random.uniform(k4, (GCN_OUTPUT_DIM,), jnp.float32, -stdv2, stdv2),
        # nn.LayerNorm defaults: weight=1, bias=0
        "g1": jnp.ones((GCN_HIDDEN_DIM,), jnp.float32),
        "be1": jnp.zeros((GCN_HIDDEN_DIM,), jnp.float32),
        "g2": jnp.ones((GCN_OUTPUT_DIM,), jnp.float32),
        "be2": jnp.zeros((GCN_OUTPUT_DIM,), jnp.float32),
    }


def gcn_reference(x, adj, p):
    """Pure-JAX reference mirroring the kernel's dtype strategy
    (bf16 matmul operands incl. adj and supports, f32 accumulation, f32 elementwise)."""
    xb = x.astype(jnp.bfloat16)
    ab = adj.astype(jnp.bfloat16)
    s1 = jnp.dot(xb, p["w1"].astype(jnp.bfloat16), preferred_element_type=jnp.float32)
    h1 = jnp.dot(ab, s1.astype(jnp.bfloat16), preferred_element_type=jnp.float32) + p["b1"]
    mu = jnp.mean(h1, -1, keepdims=True)
    var = jnp.mean((h1 - mu) ** 2, -1, keepdims=True)
    h1 = _leaky_relu((h1 - mu) * jax.lax.rsqrt(var + LN_EPS) * p["g1"] + p["be1"])

    s2 = jnp.dot(h1.astype(jnp.bfloat16), p["w2"].astype(jnp.bfloat16),
                 preferred_element_type=jnp.float32)
    h2 = jnp.dot(ab, s2.astype(jnp.bfloat16), preferred_element_type=jnp.float32) + p["b2"]
    mu = jnp.mean(h2, -1, keepdims=True)
    var = jnp.mean((h2 - mu) ** 2, -1, keepdims=True)
    return _leaky_relu((h2 - mu) * jax.lax.rsqrt(var + LN_EPS) * p["g2"] + p["be2"])


# ----------------------------------------------------------------------------- demo
if __name__ == "__main__":
    key = jax.random.PRNGKey(0)
    kp, kx, ka, kx2, ka2 = jax.random.split(key, 5)
    params = init_params(kp)

    # ---- small-graph batch (single row tile per graph) ----
    B, N = 4, 16
    x = jax.random.normal(kx, (B, N, GCN_FEATURE_DIM), jnp.float32)
    adj_raw = jax.random.uniform(ka, (B, N, N), jnp.float32)
    adj = (adj_raw + jnp.swapaxes(adj_raw, -1, -2)) / (2.0 * N)

    out = jax.block_until_ready(gcn_forward_batched(x, adj, params))
    assert out.shape == (B, N, GCN_OUTPUT_DIM)
    ref = jax.vmap(lambda xx, aa: gcn_reference(xx, aa, params))(x, adj)
    assert jnp.allclose(out, ref, atol=2e-2, rtol=2e-2), float(jnp.max(jnp.abs(out - ref)))

    # single-graph path (matches the PyTorch module's forward signature)
    out1 = jax.block_until_ready(gcn_forward(x[0], adj[0], params))
    assert out1.shape == (N, GCN_OUTPUT_DIM)
    assert jnp.allclose(out1, ref[0], atol=2e-2, rtol=2e-2)

    # ---- larger graphs exercising multi-row-tile phases + N padding ----
    B2, N2 = 2, 300   # -> TM=256, Npad=512, 2 row tiles, 3 phases
    x2 = jax.random.normal(kx2, (B2, N2, GCN_FEATURE_DIM), jnp.float32)
    adj2_raw = jax.random.uniform(ka2, (B2, N2, N2), jnp.float32)
    adj2 = (adj2_raw + jnp.swapaxes(adj2_raw, -1, -2)) / (2.0 * N2)

    out2 = jax.block_until_ready(gcn_forward_batched(x2, adj2, params))
    assert out2.shape == (B2, N2, GCN_OUTPUT_DIM)
    ref2 = jax.vmap(lambda xx, aa: gcn_reference(xx, aa, params))(x2, adj2)
    assert jnp.allclose(out2, ref2, atol=2e-2, rtol=2e-2), float(jnp.max(jnp.abs(out2 - ref2)))

    print("KERNEL_OK")
</pallas_src>

<mosaic_0001>
module attributes {stable_mosaic.version = 11 : i64} {
  func.func @_gcn_kernel(%arg0: i32, %arg1: i32, %arg2: i32, %arg3: memref<1x16x1280xbf16, #tpu.memory_space<vmem>>, %arg4: memref<1x16x16xbf16, #tpu.memory_space<vmem>>, %arg5: memref<1280x256xbf16, #tpu.memory_space<vmem>>, %arg6: memref<1x256xf32, #tpu.memory_space<vmem>>, %arg7: memref<1x256xf32, #tpu.memory_space<vmem>>, %arg8: memref<1x256xf32, #tpu.memory_space<vmem>>, %arg9: memref<256x128xbf16, #tpu.memory_space<vmem>>, %arg10: memref<1x128xf32, #tpu.memory_space<vmem>>, %arg11: memref<1x128xf32, #tpu.memory_space<vmem>>, %arg12: memref<1x128xf32, #tpu.memory_space<vmem>>, %arg13: memref<1x16x128xbf16, #tpu.memory_space<vmem>>, %arg14: memref<16x256xbf16, #tpu.memory_space<vmem>>, %arg15: memref<16x128xbf16, #tpu.memory_space<vmem>>) attributes {dimension_semantics = [#tpu.dimension_semantics<parallel>, #tpu.dimension_semantics<arbitrary>, #tpu.dimension_semantics<arbitrary>], iteration_bounds = array<i64: 4, 3, 1>, scalar_prefetch = 0 : i64, scratch_operands = 2 : i64, tpu.core_type = #tpu.core_type<tc>, window_params = [{transform_indices = @transform_0, window_bounds = array<i64: 1, 16, 1280>}, {transform_indices = @transform_1, window_bounds = array<i64: 1, 16, 16>}, {pipeline_mode = #tpu.pipeline_mode<synchronous>, transform_indices = @transform_2, window_bounds = array<i64: 1280, 256>}, {pipeline_mode = #tpu.pipeline_mode<synchronous>, transform_indices = @transform_3, window_bounds = array<i64: 1, 256>}, {pipeline_mode = #tpu.pipeline_mode<synchronous>, transform_indices = @transform_4, window_bounds = array<i64: 1, 256>}, {pipeline_mode = #tpu.pipeline_mode<synchronous>, transform_indices = @transform_5, window_bounds = array<i64: 1, 256>}, {pipeline_mode = #tpu.pipeline_mode<synchronous>, transform_indices = @transform_6, window_bounds = array<i64: 256, 128>}, {pipeline_mode = #tpu.pipeline_mode<synchronous>, transform_indices = @transform_7, window_bounds = array<i64: 1, 128>}, {pipeline_mode = #tpu.pipeline_mode<synchronous>, transform_indices = @transform_8, window_bounds = array<i64: 1, 128>}, {pipeline_mode = #tpu.pipeline_mode<synchronous>, transform_indices = @transform_9, window_bounds = array<i64: 1, 128>}, {transform_indices = @transform_10, window_bounds = array<i64: 1, 16, 128>}]} {
    %c16_i32 = arith.constant 16 : i32
    %0 = arith.muli %arg2, %c16_i32 : i32
    %1 = tpu.assume_multiple %0, 16 : i32
    %c0_i32 = arith.constant 0 : i32
    %2 = arith.cmpi eq, %arg1, %c0_i32 : i32
    %3 = arith.extui %2 : i1 to i32
    %c0_i32_0 = arith.constant 0 : i32
    %4 = arith.cmpi ne, %3, %c0_i32_0 : i32
    scf.if %4 {
      %c0 = arith.constant 0 : index
      %c0_3 = arith.constant 0 : index
      %c0_4 = arith.constant 0 : index
      %11 = vector.load %arg3[%c0, %c0_3, %c0_4] : memref<1x16x1280xbf16, #tpu.memory_space<vmem>>, vector<1x16x1280xbf16>
      %12 = vector.shape_cast %11 : vector<1x16x1280xbf16> to vector<16x1280xbf16>
      %c0_5 = arith.constant 0 : index
      %c0_6 = arith.constant 0 : index
      %13 = vector.load %arg5[%c0_5, %c0_6] : memref<1280x256xbf16, #tpu.memory_space<vmem>>, vector<1280x256xbf16>
      %cst = arith.constant dense<0.000000e+00> : vector<16x256xf32>
      %14 = tpu.matmul %12, %13, %cst {dimension_numbers = #tpu.dot_dimension_numbers<[1], [0], [0], [1], [0, 0, 1, 1], [], []>} : vector<16x1280xbf16>, vector<1280x256xbf16>, vector<16x256xf32> -> vector<16x256xf32>
      %15 = arith.truncf %14 : vector<16x256xf32> to vector<16x256xbf16>
      %16 = arith.index_cast %1 : i32 to index
      %c0_7 = arith.constant 0 : index
      %17 = vector.load %arg14[%16, %c0_7] : memref<16x256xbf16, #tpu.memory_space<vmem>>, vector<16x256xbf16>
      tpu.vector_store %arg14[%16, %c0_7], %15 {strides = array<i32>} : memref<16x256xbf16, #tpu.memory_space<vmem>>, vector<16x256xbf16>,
    } else {
    }
    %c1_i32 = arith.constant 1 : i32
    %5 = arith.cmpi eq, %arg1, %c1_i32 : i32
    %6 = arith.extui %5 : i1 to i32
    %c0_i32_1 = arith.constant 0 : i32
    %7 = arith.cmpi ne, %6, %c0_i32_1 : i32
    scf.if %7 {
      %c0 = arith.constant 0 : index
      %c0_3 = arith.constant 0 : index
      %c0_4 = arith.constant 0 : index
      %11 = vector.load %arg4[%c0, %c0_3, %c0_4] : memref<1x16x16xbf16, #tpu.memory_space<vmem>>, vector<1x16x16xbf16>
      %12 = vector.shape_cast %11 : vector<1x16x16xbf16> to vector<16x16xbf16>
      %c0_5 = arith.constant 0 : index
      %c0_6 = arith.constant 0 : index
      %13 = vector.load %arg14[%c0_5, %c0_6] : memref<16x256xbf16, #tpu.memory_space<vmem>>, vector<16x256xbf16>
      %cst = arith.constant dense<0.000000e+00> : vector<16x256xf32>
      %14 = tpu.matmul %12, %13, %cst {dimension_numbers = #tpu.dot_dimension_numbers<[1], [0], [0], [1], [0, 0, 1, 1], [], []>} : vector<16x16xbf16>, vector<16x256xbf16>, vector<16x256xf32> -> vector<16x256xf32>
      %c0_7 = arith.constant 0 : index
      %c0_8 = arith.constant 0 : index
      %15 = vector.load %arg6[%c0_7, %c0_8] : memref<1x256xf32, #tpu.memory_space<vmem>>, vector<1x256xf32>
      %16 = vector.broadcast %15 : vector<1x256xf32> to vector<16x256xf32>
      %17 = arith.addf %14, %16 : vector<16x256xf32>
      %cst_9 = arith.constant dense<0.000000e+00> : vector<16xf32>
      %18 = vector.multi_reduction <add>, %17, %cst_9 [1] : vector<16x256xf32> to vector<16xf32>
      %19 = vector.shape_cast %18 : vector<16xf32> to vector<16x1xf32>
      %cst_10 = arith.constant 2.560000e+02 : f32
      %20 = vector.broadcast %cst_10 : f32 to vector<16x1xf32>
      %21 = arith.divf %19, %20 : vector<16x1xf32>
      %22 = vector.broadcast %21 : vector<16x1xf32> to vector<16x256xf32>
      %23 = arith.subf %17, %22 : vector<16x256xf32>
      %24 = arith.mulf %23, %23 : vector<16x256xf32>
      %cst_11 = arith.constant dense<0.000000e+00> : vector<16xf32>
      %25 = vector.multi_reduction <add>, %24, %cst_11 [1] : vector<16x256xf32> to vector<16xf32>
      %26 = vector.shape_cast %25 : vector<16xf32> to vector<16x1xf32>
      %cst_12 = arith.constant 2.560000e+02 : f32
      %27 = vector.broadcast %cst_12 : f32 to vector<16x1xf32>
      %28 = arith.divf %26, %27 : vector<16x1xf32>
      %29 = vector.broadcast %21 : vector<16x1xf32> to vector<16x256xf32>
      %30 = arith.subf %17, %29 : vector<16x256xf32>
      %cst_13 = arith.constant 9.99999974E-6 : f32
      %31 = vector.broadcast %cst_13 : f32 to vector<16x1xf32>
      %32 = arith.addf %28, %31 : vector<16x1xf32>
      %33 = math.rsqrt %32 : vector<16x1xf32>
      %34 = vector.broadcast %33 : vector<16x1xf32> to vector<16x256xf32>
      %35 = arith.mulf %30, %34 : vector<16x256xf32>
      %c0_14 = arith.constant 0 : index
      %c0_15 = arith.constant 0 : index
      %36 = vector.load %arg7[%c0_14, %c0_15] : memref<1x256xf32, #tpu.memory_space<vmem>>, vector<1x256xf32>
      %37 = vector.broadcast %36 : vector<1x256xf32> to vector<16x256xf32>
      %38 = arith.mulf %35, %37 : vector<16x256xf32>
      %c0_16 = arith.constant 0 : index
      %c0_17 = arith.constant 0 : index
      %39 = vector.load %arg8[%c0_16, %c0_17] : memref<1x256xf32, #tpu.memory_space<vmem>>, vector<1x256xf32>
      %40 = vector.broadcast %39 : vector<1x256xf32> to vector<16x256xf32>
      %41 = arith.addf %38, %40 : vector<16x256xf32>
      %cst_18 = arith.constant 0.000000e+00 : f32
      %42 = vector.broadcast %cst_18 : f32 to vector<16x256xf32>
      %43 = arith.cmpf oge, %41, %42 : vector<16x256xf32>
      %cst_19 = arith.constant 2.000000e-01 : f32
      %44 = vector.broadcast %cst_19 : f32 to vector<16x256xf32>
      %45 = arith.mulf %44, %41 : vector<16x256xf32>
      %46 = arith.select %43, %41, %45 : vector<16x256xi1>, vector<16x256xf32>
      %47 = arith.truncf %46 : vector<16x256xf32> to vector<16x256xbf16>
      %c0_20 = arith.constant 0 : index
      %c0_21 = arith.constant 0 : index
      %48 = vector.load %arg9[%c0_20, %c0_21] : memref<256x128xbf16, #tpu.memory_space<vmem>>, vector<256x128xbf16>
      %cst_22 = arith.constant dense<0.000000e+00> : vector<16x128xf32>
      %49 = tpu.matmul %47, %48, %cst_22 {dimension_numbers = #tpu.dot_dimension_numbers<[1], [0], [0], [1], [0, 0, 1, 1], [], []>} : vector<16x256xbf16>, vector<256x128xbf16>, vector<16x128xf32> -> vector<16x128xf32>
      %50 = arith.truncf %49 : vector<16x128xf32> to vector<16x128xbf16>
      %51 = arith.index_cast %1 : i32 to index
      %c0_23 = arith.constant 0 : index
      %52 = vector.load %arg15[%51, %c0_23] : memref<16x128xbf16, #tpu.memory_space<vmem>>, vector<16x128xbf16>
      tpu.vector_store %arg15[%51, %c0_23], %50 {strides = array<i32>} : memref<16x128xbf16, #tpu.memory_space<vmem>>, vector<16x128xbf16>,
    } else {
    }
    %c2_i32 = arith.constant 2 : i32
    %8 = arith.cmpi eq, %arg1, %c2_i32 : i32
    %9 = arith.extui %8 : i1 to i32
    %c0_i32_2 = arith.constant 0 : i32
    %10 = arith.cmpi ne, %9, %c0_i32_2 : i32
    scf.if %10 {
      %c0 = arith.constant 0 : index
      %c0_3 = arith.constant 0 : index
      %c0_4 = arith.constant 0 : index
      %11 = vector.load %arg4[%c0, %c0_3, %c0_4] : memref<1x16x16xbf16, #tpu.memory_space<vmem>>, vector<1x16x16xbf16>
      %12 = vector.shape_cast %11 : vector<1x16x16xbf16> to vector<16x16xbf16>
      %c0_5 = arith.constant 0 : index
      %c0_6 = arith.constant 0 : index
      %13 = vector.load %arg15[%c0_5, %c0_6] : memref<16x128xbf16, #tpu.memory_space<vmem>>, vector<16x128xbf16>
      %cst = arith.constant dense<0.000000e+00> : vector<16x128xf32>
      %14 = tpu.matmul %12, %13, %cst {dimension_numbers = #tpu.dot_dimension_numbers<[1], [0], [0], [1], [0, 0, 1, 1], [], []>} : vector<16x16xbf16>, vector<16x128xbf16>, vector<16x128xf32> -> vector<16x128xf32>
      %c0_7 = arith.constant 0 : index
      %c0_8 = arith.constant 0 : index
      %15 = vector.load %arg10[%c0_7, %c0_8] : memref<1x128xf32, #tpu.memory_space<vmem>>, vector<1x128xf32>
      %16 = vector.broadcast %15 : vector<1x128xf32> to vector<16x128xf32>
      %17 = arith.addf %14, %16 : vector<16x128xf32>
      %18 = tpu.iota {dimensions = array<i32: 1>} : vector<16x128xi32>
      %c64_i32 = arith.constant 64 : i32
      %19 = vector.broadcast %c64_i32 : i32 to vector<16x128xi32>
      %20 = arith.cmpi slt, %18, %19 : vector<16x128xi32>
      %cst_9 = arith.constant dense<0.000000e+00> : vector<16xf32>
      %21 = vector.multi_reduction <add>, %17, %cst_9 [1] : vector<16x128xf32> to vector<16xf32>
      %22 = vector.shape_cast %21 : vector<16xf32> to vector<16x1xf32>
      %cst_10 = arith.constant 1.562500e-02 : f32
      %23 = vector.broadcast %cst_10 : f32 to vector<16x1xf32>
      %24 = arith.mulf %22, %23 : vector<16x1xf32>
      %25 = vector.broadcast %24 : vector<16x1xf32> to vector<16x128xf32>
      %26 = arith.subf %17, %25 : vector<16x128xf32>
      %cst_11 = arith.constant 0.000000e+00 : f32
      %27 = vector.broadcast %cst_11 : f32 to vector<16x128xf32>
      %28 = arith.select %20, %26, %27 : vector<16x128xi1>, vector<16x128xf32>
      %29 = arith.mulf %28, %28 : vector<16x128xf32>
      %cst_12 = arith.constant dense<0.000000e+00> : vector<16xf32>
      %30 = vector.multi_reduction <add>, %29, %cst_12 [1] : vector<16x128xf32> to vector<16xf32>
      %31 = vector.shape_cast %30 : vector<16xf32> to vector<16x1xf32>
      %cst_13 = arith.constant 1.562500e-02 : f32
      %32 = vector.broadcast %cst_13 : f32 to vector<16x1xf32>
      %33 = arith.mulf %31, %32 : vector<16x1xf32>
      %34 = vector.broadcast %24 : vector<16x1xf32> to vector<16x128xf32>
      %35 = arith.subf %17, %34 : vector<16x128xf32>
      %cst_14 = arith.constant 9.99999974E-6 : f32
      %36 = vector.broadcast %cst_14 : f32 to vector<16x1xf32>
      %37 = arith.addf %33, %36 : vector<16x1xf32>
      %38 = math.rsqrt %37 : vector<16x1xf32>
      %39 = vector.broadcast %38 : vector<16x1xf32> to vector<16x128xf32>
      %40 = arith.mulf %35, %39 : vector<16x128xf32>
      %c0_15 = arith.constant 0 : index
      %c0_16 = arith.constant 0 : index
      %41 = vector.load %arg11[%c0_15, %c0_16] : memref<1x128xf32, #tpu.memory_space<vmem>>, vector<1x128xf32>
      %42 = vector.broadcast %41 : vector<1x128xf32> to vector<16x128xf32>
      %43 = arith.mulf %40, %42 : vector<16x128xf32>
      %c0_17 = arith.constant 0 : index
      %c0_18 = arith.constant 0 : index
      %44 = vector.load %arg12[%c0_17, %c0_18] : memref<1x128xf32, #tpu.memory_space<vmem>>, vector<1x128xf32>
      %45 = vector.broadcast %44 : vector<1x128xf32> to vector<16x128xf32>
      %46 = arith.addf %43, %45 : vector<16x128xf32>
      %cst_19 = arith.constant 0.000000e+00 : f32
      %47 = vector.broadcast %cst_19 : f32 to vector<16x128xf32>
      %48 = arith.cmpf oge, %46, %47 : vector<16x128xf32>
      %cst_20 = arith.constant 2.000000e-01 : f32
      %49 = vector.broadcast %cst_20 : f32 to vector<16x128xf32>
      %50 = arith.mulf %49, %46 : vector<16x128xf32>
      %51 = arith.select %48, %46, %50 : vector<16x128xi1>, vector<16x128xf32>
      %52 = arith.truncf %51 : vector<16x128xf32> to vector<16x128xbf16>
      %c0_21 = arith.constant 0 : index
      %c0_22 = arith.constant 0 : index
      %c0_23 = arith.constant 0 : index
      %53 = vector.load %arg13[%c0_21, %c0_22, %c0_23] : memref<1x16x128xbf16, #tpu.memory_space<vmem>>, vector<1x16x128xbf16>
      %54 = vector.shape_cast %53 : vector<1x16x128xbf16> to vector<16x128xbf16>
      %55 = vector.shape_cast %52 : vector<16x128xbf16> to vector<1x16x128xbf16>
      tpu.vector_store %arg13[%c0_21, %c0_22, %c0_23], %55 {strides = array<i32>} : memref<1x16x128xbf16, #tpu.memory_space<vmem>>, vector<1x16x128xbf16>,
    } else {
    }
    return
  }
  func.func @transform_0(%arg0: i32, %arg1: i32, %arg2: i32) -> (i32, i32, i32) {
    %c0_i32 = arith.constant 0 : i32
    %0 = arith.cmpi eq, %arg1, %c0_i32 : i32
    %c0_i32_0 = arith.constant 0 : i32
    %1 = arith.select %0, %arg2, %c0_i32_0 : i32
    %c0_i32_1 = arith.constant 0 : i32
    %c0_i32_2 = arith.constant 0 : i32
    return %arg0, %1, %c0_i32_1 : i32, i32, i32
  }
  func.func @transform_1(%arg0: i32, %arg1: i32, %arg2: i32) -> (i32, i32, i32) {
    %c0_i32 = arith.constant 0 : i32
    %0 = arith.cmpi eq, %arg1, %c0_i32 : i32
    %c0_i32_0 = arith.constant 0 : i32
    %1 = arith.select %0, %c0_i32_0, %arg2 : i32
    %c0_i32_1 = arith.constant 0 : i32
    %c0_i32_2 = arith.constant 0 : i32
    return %arg0, %1, %c0_i32_1 : i32, i32, i32
  }
  func.func @transform_2(%arg0: i32, %arg1: i32, %arg2: i32) -> (i32, i32) {
    %c0_i32 = arith.constant 0 : i32
    %c0_i32_0 = arith.constant 0 : i32
    %c0_i32_1 = arith.constant 0 : i32
    return %c0_i32, %c0_i32_0 : i32, i32
  }
  func.func @transform_3(%arg0: i32, %arg1: i32, %arg2: i32) -> (i32, i32) {
    %c0_i32 = arith.constant 0 : i32
    %c0_i32_0 = arith.constant 0 : i32
    %c0_i32_1 = arith.constant 0 : i32
    return %c0_i32, %c0_i32_0 : i32, i32
  }
  func.func @transform_4(%arg0: i32, %arg1: i32, %arg2: i32) -> (i32, i32) {
    %c0_i32 = arith.constant 0 : i32
    %c0_i32_0 = arith.constant 0 : i32
    %c0_i32_1 = arith.constant 0 : i32
    return %c0_i32, %c0_i32_0 : i32, i32
  }
  func.func @transform_5(%arg0: i32, %arg1: i32, %arg2: i32) -> (i32, i32) {
    %c0_i32 = arith.constant 0 : i32
    %c0_i32_0 = arith.constant 0 : i32
    %c0_i32_1 = arith.constant 0 : i32
    return %c0_i32, %c0_i32_0 : i32, i32
  }
  func.func @transform_6(%arg0: i32, %arg1: i32, %arg2: i32) -> (i32, i32) {
    %c0_i32 = arith.constant 0 : i32
    %c0_i32_0 = arith.constant 0 : i32
    %c0_i32_1 = arith.constant 0 : i32
    return %c0_i32, %c0_i32_0 : i32, i32
  }
  func.func @transform_7(%arg0: i32, %arg1: i32, %arg2: i32) -> (i32, i32) {
    %c0_i32 = arith.constant 0 : i32
    %c0_i32_0 = arith.constant 0 : i32
    %c0_i32_1 = arith.constant 0 : i32
    return %c0_i32, %c0_i32_0 : i32, i32
  }
  func.func @transform_8(%arg0: i32, %arg1: i32, %arg2: i32) -> (i32, i32) {
    %c0_i32 = arith.constant 0 : i32
    %c0_i32_0 = arith.constant 0 : i32
    %c0_i32_1 = arith.constant 0 : i32
    return %c0_i32, %c0_i32_0 : i32, i32
  }
  func.func @transform_9(%arg0: i32, %arg1: i32, %arg2: i32) -> (i32, i32) {
    %c0_i32 = arith.constant 0 : i32
    %c0_i32_0 = arith.constant 0 : i32
    %c0_i32_1 = arith.constant 0 : i32
    return %c0_i32, %c0_i32_0 : i32, i32
  }
  func.func @transform_10(%arg0: i32, %arg1: i32, %arg2: i32) -> (i32, i32, i32) {
    %c2_i32 = arith.constant 2 : i32
    %0 = arith.cmpi eq, %arg1, %c2_i32 : i32
    %c0_i32 = arith.constant 0 : i32
    %1 = arith.select %0, %arg2, %c0_i32 : i32
    %c0_i32_0 = arith.constant 0 : i32
    %c0_i32_1 = arith.constant 0 : i32
    return %arg0, %1, %c0_i32_0 : i32, i32, i32
  }
}

</mosaic_0001>

<llo_original>
// kernel: tpu_custom_call.1
$region0: #{tpu_custom_call.1}
  #allocation0 [shape = 'u32[]', space=smem, size = 0x4, offset = 0x4, fixed_abs, tag = 'smem constant byte address 0x4 - core index']
  #allocation1 [shape = 'u32[144,128]{1,0:T(1,128)}', space=vmem, size = 0x12000, scoped, tag = 'internal scratch']
  #allocation2 [shape = 'bf16[16,256]{1,0:T(16,128)(2,1)}', space=vmem, size = 0x2000, scoped, tag = 'scratch operand']
  #allocation3 [shape = 'bf16[16,128]{1,0:T(16,128)(2,1)}', space=vmem, size = 0x1000, scoped, tag = 'scratch operand']
  %s0 = inlined_call_operand.hbm [shape: bf16[4,16,1280], index: 0, kind: input, shape index: {}]
  %s1 = inlined_call_operand.hbm [shape: bf16[4,16,16], index: 1, kind: input, shape index: {}]
  %s2 = inlined_call_operand.hbm [shape: bf16[1280,256], index: 2, kind: input, shape index: {}]
  %s3 = inlined_call_operand.vmem [shape: f32[1,256], index: 3, kind: input, shape index: {}]
  %s4 = inlined_call_operand.vmem [shape: f32[1,256], index: 4, kind: input, shape index: {}]
  %s5 = inlined_call_operand.vmem [shape: f32[1,256], index: 5, kind: input, shape index: {}]
  %s6 = inlined_call_operand.hbm [shape: bf16[256,128], index: 6, kind: input, shape index: {}]
  %s7 = inlined_call_operand.vmem [shape: f32[1,128], index: 7, kind: input, shape index: {}]
  %s8 = inlined_call_operand.vmem [shape: f32[1,128], index: 8, kind: input, shape index: {}]
  %s9 = inlined_call_operand.vmem [shape: f32[1,128], index: 9, kind: input, shape index: {}]
  %s10 = inlined_call_operand.hbm [shape: bf16[4,16,128], index: 10, kind: output, shape index: {}]
  %s11 = sld [smem:[#allocation0]]
  $region101: #{tpu_custom_call.1} parent=0
    _
  %s13 = ssub.s32 1, %s11
  %s14 = scalar_select 0, %s13, %s11
  $region1: #{tpu_custom_call.1} parent=0
    #allocation4 [shape = 'u8[81920]{0}', space=vmem, size = 0x14000, scoped, tag = 'input window, operand 0']
    #allocation5 [shape = 's32[2]{0}', space=sflag, size = 0x8, scoped, tag = 'scoped memory for tpu_custom_call.1']
    #allocation6 [shape = 's32[2]{0}', space=sflag, size = 0x8, scoped, tag = 'scoped memory for tpu_custom_call.1']
    #allocation7 [shape = 'u8[8192]{0}', space=vmem, size = 0x2000, scoped, tag = 'input window, operand 1']
    #allocation8 [shape = 's32[2]{0}', space=sflag, size = 0x8, scoped, tag = 'scoped memory for tpu_custom_call.1']
    #allocation9 [shape = 'u8[655360]{0}', space=vmem, size = 0xa0000, scoped, tag = 'input window, operand 2, single buffered']
    #allocation10 [shape = 'u8[65536]{0}', space=vmem, size = 0x10000, scoped, tag = 'input window, operand 6, single buffered']
    #allocation11 [shape = 's32[1]{0}', space=sflag, size = 0x4, scoped, tag = 'scoped memory for tpu_custom_call.1']
    #allocation12 [shape = 'u8[8192]{0}', space=vmem, size = 0x2000, scoped, tag = 'output window, operand 0']
    %15 = vsyncpa [#allocation5], 0
    %s16 = scalar_lea.sflag [#allocation5], 1
    %17 = vsyncpa %s16, 0
    %18 = vsyncpa [#allocation8], 0
    %s19 = scalar_lea.sflag [#allocation8], 1
    %20 = vsyncpa %s19, 0
    %21 = vsyncpa [#allocation11], 0
    %22 = vsyncpa [#allocation6], 0
    %s23 = scalar_lea.sflag [#allocation6], 1
    %24 = vsyncpa %s23, 0
    loop: start=0, step=1, limit=14
    $region2: #{tpu_custom_call.1} parent=1 // loop_pre_header
      _
    $region3: #{tpu_custom_call.1} parent=1 // loop_header
      %s26 = sphi 0, %s30
      %p27 = scmp.ge.s32.totalorder %s26, 14
      %s33 = sphi 0, %s52
      %s34 = sphi 0, %s48
      %s35 = sphi 0, %s44
      %s36 = sphi 0, %s33
      %s37 = sphi 0, %s34
      %s38 = sphi 0, %s35
      %s39 = sphi 0, %s36
      %s40 = sphi 0, %s37
      %s41 = sphi 0, %s38
      %s61 = sphi 0, %s63
      %s64 = sphi 0, %s61
      %s65 = sphi 0, %s64
      %s81 = sphi 0, %s65
      %s93 = sphi 0, %s95
      %s96 = sphi 0, %s93
      %s97 = sphi 0, %s96
      %s113 = sphi 0, %s97
      %s117 = sphi 0, %s117
      %s119 = sphi 0, %s117
      %s120 = sphi 0, %s119
      %s134 = sphi 0, %s120
      %s138 = sphi 0, %s138
      %s140 = sphi 0, %s138
      %s141 = sphi 0, %s140
      %s155 = sphi 0, %s141
      %s159 = sphi 0, %s159
      %s161 = sphi 0, %s159
      %s162 = sphi 0, %s161
      %s176 = sphi 0, %s162
      %s180 = sphi 0, %s180
      %s182 = sphi 0, %s180
      %s183 = sphi 0, %s182
      %s197 = sphi 0, %s183
      %s201 = sphi 0, %s201
      %s203 = sphi 0, %s201
      %s204 = sphi 0, %s203
      %s218 = sphi 0, %s204
      %s222 = sphi 0, %s222
      %s224 = sphi 0, %s222
      %s225 = sphi 0, %s224
      %s239 = sphi 0, %s225
      %s243 = sphi 0, %s243
      %s245 = sphi 0, %s243
      %s246 = sphi 0, %s245
      %s260 = sphi 0, %s246
      %s264 = sphi 0, %s264
      %s266 = sphi 0, %s264
      %s267 = sphi 0, %s266
      %s281 = sphi 0, %s267
      %s293 = sphi 0, %s295
      %s296 = sphi 0, %s293
      %s297 = sphi 0, %s296
      %s313 = sphi 0, %s297
    $region4: #{tpu_custom_call.1} parent=1 // loop_header_branch
      %29 = sbr.rel (%p27) target = $region8
    $region5: #{tpu_custom_call.1} parent=1 // loop_body
      %s31 = ssub.s32 %s26, 1
      %s32 = ssub.s32 %s26, 2
      %s42 = sadd.s32 1, %s35
      %p43 = scmp.ge.s32.totalorder %s42, 1
      %s44 = scalar_select %p43, 0, %s42
      %s45 = sadd.s32 1, %s34
      %s46 = scalar_select %p43, %s45, %s34
      %p47 = scmp.ge.s32.totalorder %s46, 3
      %s48 = scalar_select %p47, 0, %s46
      %s49 = sadd.s32 1, %s33
      %s50 = scalar_select %p47, %s49, %s33
      %p51 = scmp.ge.s32.totalorder %s50, 4
      %s52 = scalar_select %p51, 0, %s50
      %p53 = scmp.eq.s32.totalorder %s34, 0
      %s54 = scalar_select %p53, %s35, 0
      %p55 = scmp.eq.s32.totalorder %s48, 0
      %s56 = scalar_select %p55, %s44, 0
      %s57 = ssub.s32 %s33, %s52
      %s58 = ssub.s32 %s54, %s56
      %s59 = sor.u32 %s57, %s58
      %p60 = scmp.eq.s32.totalorder %s59, 0
      %s62 = sadd.s32 %s61, 1
      %s63 = scalar_select %p60, %s61, %s62
      %p66 = pneg %p60
      %p67 = scmp.eq.s32.totalorder %s26, 11
      %p68 = por %p66, %p67
      %p69 = scmp.ne.s32.totalorder %s61, %s64
      %p70 = scmp.eq.s32.totalorder %s26, 0
      %p71 = por %p69, %p70
      %p72 = scmp.ne.s32.totalorder %s61, %s64
      %p73 = scmp.eq.s32.totalorder %s31, 11
      %p74 = por %p72, %p73
      %p75 = scmp.ne.s32.totalorder %s64, %s65
      %p76 = scmp.eq.s32.totalorder %s31, 0
      %p77 = por %p75, %p76
      %p78 = scmp.ne.s32.totalorder %s64, %s65
      %p79 = scmp.eq.s32.totalorder %s32, 11
      %p80 = por %p78, %p79
      %p82 = scmp.ne.s32.totalorder %s65, %s81
      %p83 = scmp.eq.s32.totalorder %s32, 0
      %p84 = por %p82, %p83
      %p85 = scmp.eq.s32.totalorder %s34, 0
      %s86 = scalar_select %p85, 0, %s35
      %p87 = scmp.eq.s32.totalorder %s48, 0
      %s88 = scalar_select %p87, 0, %s44
      %s89 = ssub.s32 %s33, %s52
      %s90 = ssub.s32 %s86, %s88
      %s91 = sor.u32 %s89, %s90
      %p92 = scmp.eq.s32.totalorder %s91, 0
      %s94 = sadd.s32 %s93, 1
      %s95 = scalar_select %p92, %s93, %s94
      %p98 = pneg %p92
      %p99 = scmp.eq.s32.totalorder %s26, 11
      %p100 = por %p98, %p99
      %p101 = scmp.ne.s32.totalorder %s93, %s96
      %p102 = scmp.eq.s32.totalorder %s26, 0
      %p103 = por %p101, %p102
      %p104 = scmp.ne.s32.totalorder %s93, %s96
      %p105 = scmp.eq.s32.totalorder %s31, 11
      %p106 = por %p104, %p105
      %p107 = scmp.ne.s32.totalorder %s96, %s97
      %p108 = scmp.eq.s32.totalorder %s31, 0
      %p109 = por %p107, %p108
      %p110 = scmp.ne.s32.totalorder %s96, %s97
      %p111 = scmp.eq.s32.totalorder %s32, 11
      %p112 = por %p110, %p111
      %p114 = scmp.ne.s32.totalorder %s97, %s113
      %p115 = scmp.eq.s32.totalorder %s32, 0
      %p116 = por %p114, %p115
      %s118 = sadd.s32 %s117, 1
      %p121 = scmp.eq.s32.totalorder %s26, 11
      %p122 = scmp.ne.s32.totalorder %s117, %s119
      %p123 = scmp.eq.s32.totalorder %s26, 0
      %p124 = por %p122, %p123
      %p125 = scmp.ne.s32.totalorder %s117, %s119
      %p126 = scmp.eq.s32.totalorder %s31, 11
      %p127 = por %p125, %p126
      %p128 = scmp.ne.s32.totalorder %s119, %s120
      %p129 = scmp.eq.s32.totalorder %s31, 0
      %p130 = por %p128, %p129
      %p131 = scmp.ne.s32.totalorder %s119, %s120
      %p132 = scmp.eq.s32.totalorder %s32, 11
      %p133 = por %p131, %p132
      %p135 = scmp.ne.s32.totalorder %s120, %s134
      %p136 = scmp.eq.s32.totalorder %s32, 0
      %p137 = por %p135, %p136
      %s139 = sadd.s32 %s138, 1
      %p142 = scmp.eq.s32.totalorder %s26, 11
      %p143 = scmp.ne.s32.totalorder %s138, %s140
      %p144 = scmp.eq.s32.totalorder %s26, 0
      %p145 = por %p143, %p144
      %p146 = scmp.ne.s32.totalorder %s138, %s140
      %p147 = scmp.eq.s32.totalorder %s31, 11
      %p148 = por %p146, %p147
      %p149 = scmp.ne.s32.totalorder %s140, %s141
      %p150 = scmp.eq.s32.totalorder %s31, 0
      %p151 = por %p149, %p150
      %p152 = scmp.ne.s32.totalorder %s140, %s141
      %p153 = scmp.eq.s32.totalorder %s32, 11
      %p154 = por %p152, %p153
      %p156 = scmp.ne.s32.totalorder %s141, %s155
      %p157 = scmp.eq.s32.totalorder %s32, 0
      %p158 = por %p156, %p157
      %s160 = sadd.s32 %s159, 1
      %p163 = scmp.eq.s32.totalorder %s26, 11
      %p164 = scmp.ne.s32.totalorder %s159, %s161
      %p165 = scmp.eq.s32.totalorder %s26, 0
      %p166 = por %p164, %p165
      %p167 = scmp.ne.s32.totalorder %s159, %s161
      %p168 = scmp.eq.s32.totalorder %s31, 11
      %p169 = por %p167, %p168
      %p170 = scmp.ne.s32.totalorder %s161, %s162
      %p171 = scmp.eq.s32.totalorder %s31, 0
      %p172 = por %p170, %p171
      %p173 = scmp.ne.s32.totalorder %s161, %s162
      %p174 = scmp.eq.s32.totalorder %s32, 11
      %p175 = por %p173, %p174
      %p177 = scmp.ne.s32.totalorder %s162, %s176
      %p178 = scmp.eq.s32.totalorder %s32, 0
      %p179 = por %p177, %p178
      %s181 = sadd.s32 %s180, 1
      %p184 = scmp.eq.s32.totalorder %s26, 11
      %p185 = scmp.ne.s32.totalorder %s180, %s182
      %p186 = scmp.eq.s32.totalorder %s26, 0
      %p187 = por %p185, %p186
      %p188 = scmp.ne.s32.totalorder %s180, %s182
      %p189 = scmp.eq.s32.totalorder %s31, 11
      %p190 = por %p188, %p189
      %p191 = scmp.ne.s32.totalorder %s182, %s183
      %p192 = scmp.eq.s32.totalorder %s31, 0
      %p193 = por %p191, %p192
      %p194 = scmp.ne.s32.totalorder %s182, %s183
      %p195 = scmp.eq.s32.totalorder %s32, 11
      %p196 = por %p194, %p195
      %p198 = scmp.ne.s32.totalorder %s183, %s197
      %p199 = scmp.eq.s32.totalorder %s32, 0
      %p200 = por %p198, %p199
      %s202 = sadd.s32 %s201, 1
      %p205 = scmp.eq.s32.totalorder %s26, 11
      %p206 = scmp.ne.s32.totalorder %s201, %s203
      %p207 = scmp.eq.s32.totalorder %s26, 0
      %p208 = por %p206, %p207
      %p209 = scmp.ne.s32.totalorder %s201, %s203
      %p210 = scmp.eq.s32.totalorder %s31, 11
      %p211 = por %p209, %p210
      %p212 = scmp.ne.s32.totalorder %s203, %s204
      %p213 = scmp.eq.s32.totalorder %s31, 0
      %p214 = por %p212, %p213
      %p215 = scmp.ne.s32.totalorder %s203, %s204
      %p216 = scmp.eq.s32.totalorder %s32, 11
      %p217 = por %p215, %p216
      %p219 = scmp.ne.s32.totalorder %s204, %s218
      %p220 = scmp.eq.s32.totalorder %s32, 0
      %p221 = por %p219, %p220
      %s223 = sadd.s32 %s222, 1
      %p226 = scmp.eq.s32.totalorder %s26, 11
      %p227 = scmp.ne.s32.totalorder %s222, %s224
      %p228 = scmp.eq.s32.totalorder %s26, 0
      %p229 = por %p227, %p228
      %p230 = scmp.ne.s32.totalorder %s222, %s224
      %p231 = scmp.eq.s32.totalorder %s31, 11
      %p232 = por %p230, %p231
      %p233 = scmp.ne.s32.totalorder %s224, %s225
      %p234 = scmp.eq.s32.totalorder %s31, 0
      %p235 = por %p233, %p234
      %p236 = scmp.ne.s32.totalorder %s224, %s225
      %p237 = scmp.eq.s32.totalorder %s32, 11
      %p238 = por %p236, %p237
      %p240 = scmp.ne.s32.totalorder %s225, %s239
      %p241 = scmp.eq.s32.totalorder %s32, 0
      %p242 = por %p240, %p241
      %s244 = sadd.s32 %s243, 1
      %p247 = scmp.eq.s32.totalorder %s26, 11
      %p248 = scmp.ne.s32.totalorder %s243, %s245
      %p249 = scmp.eq.s32.totalorder %s26, 0
      %p250 = por %p248, %p249
      %p251 = scmp.ne.s32.totalorder %s243, %s245
      %p252 = scmp.eq.s32.totalorder %s31, 11
      %p253 = por %p251, %p252
      %p254 = scmp.ne.s32.totalorder %s245, %s246
      %p255 = scmp.eq.s32.totalorder %s31, 0
      %p256 = por %p254, %p255
      %p257 = scmp.ne.s32.totalorder %s245, %s246
      %p258 = scmp.eq.s32.totalorder %s32, 11
      %p259 = por %p257, %p258
      %p261 = scmp.ne.s32.totalorder %s246, %s260
      %p262 = scmp.eq.s32.totalorder %s32, 0
      %p263 = por %p261, %p262
      %s265 = sadd.s32 %s264, 1
      %p268 = scmp.eq.s32.totalorder %s26, 11
      %p269 = scmp.ne.s32.totalorder %s264, %s266
      %p270 = scmp.eq.s32.totalorder %s26, 0
      %p271 = por %p269, %p270
      %p272 = scmp.ne.s32.totalorder %s264, %s266
      %p273 = scmp.eq.s32.totalorder %s31, 11
      %p274 = por %p272, %p273
      %p275 = scmp.ne.s32.totalorder %s266, %s267
      %p276 = scmp.eq.s32.totalorder %s31, 0
      %p277 = por %p275, %p276
      %p278 = scmp.ne.s32.totalorder %s266, %s267
      %p279 = scmp.eq.s32.totalorder %s32, 11
      %p280 = por %p278, %p279
      %p282 = scmp.ne.s32.totalorder %s267, %s281
      %p283 = scmp.eq.s32.totalorder %s32, 0
      %p284 = por %p282, %p283
      %p285 = scmp.eq.s32.totalorder %s34, 2
      %s286 = scalar_select %p285, %s35, 0
      %p287 = scmp.eq.s32.totalorder %s48, 2
      %s288 = scalar_select %p287, %s44, 0
      %s289 = ssub.s32 %s33, %s52
      %s290 = ssub.s32 %s286, %s288
      %s291 = sor.u32 %s289, %s290
      %p292 = scmp.eq.s32.totalorder %s291, 0
      %s294 = sadd.s32 %s293, 1
      %s295 = scalar_select %p292, %s293, %s294
      %p298 = pneg %p292
      %p299 = scmp.eq.s32.totalorder %s26, 11
      %p300 = por %p298, %p299
      %p301 = scmp.ne.s32.totalorder %s293, %s296
      %p302 = scmp.eq.s32.totalorder %s26, 0
      %p303 = por %p301, %p302
      %p304 = scmp.ne.s32.totalorder %s293, %s296
      %p305 = scmp.eq.s32.totalorder %s31, 11
      %p306 = por %p304, %p305
      %p307 = scmp.ne.s32.totalorder %s296, %s297
      %p308 = scmp.eq.s32.totalorder %s31, 0
      %p309 = por %p307, %p308
      %p310 = scmp.ne.s32.totalorder %s296, %s297
      %p311 = scmp.eq.s32.totalorder %s32, 11
      %p312 = por %p310, %p311
      %p314 = scmp.ne.s32.totalorder %s297, %s313
      %p315 = scmp.eq.s32.totalorder %s32, 0
      %p316 = por %p314, %p315
      %p317 = scmp.le.s32.totalorder 1, %s26
      %p318 = scmp.lt.s32.totalorder %s26, 13
      %p319 = pnand %p317, %p318
      %p320 = pneg %p319
      // Predicated region
      $region9: #{tpu_custom_call.1} parent=5 // pred_check
        _
      $region10: #{tpu_custom_call.1} parent=5 // pred_check_branch
        %322 = sbr.rel (%p319) target = $region12
      $region11: #{tpu_custom_call.1} parent=5 // pred_region
        %s323 = ssub.s32 %s26, 1
        // Predicated region
        $region13: #{tpu_custom_call.1} parent=11 // pred_check
          %p324 = pneg %p130
        $region14: #{tpu_custom_call.1} parent=11 // pred_check_branch
          %326 = sbr.rel (%p324) target = $region16
        $region15: #{tpu_custom_call.1} parent=11 // pred_region
          %s328 = ssub.s32 20480, 20480
          %329 = vsyncadd [#allocation8], %s328
          %s330 = sshll.u32 [#allocation9], 4
          %s331 = int_to_ptr.vmem [resolvable:$true] %s330
          %336 = dma.hbm_to_vmem [thread:$0]  %s2, 20480, %s331, [#allocation8], 128, 128, 8
        $region16: #{tpu_custom_call.1} parent=11 // pred_fallthru
          _
        // Predicated region
        $region17: #{tpu_custom_call.1} parent=11 // pred_check
          %p337 = pneg %p151
        $region18: #{tpu_custom_call.1} parent=11 // pred_check_branch
          %339 = sbr.rel (%p337) target = $region20
        $region19: #{tpu_custom_call.1} parent=11 // pred_region
          _
        $region20: #{tpu_custom_call.1} parent=11 // pred_fallthru
          _
        // Predicated region
        $region21: #{tpu_custom_call.1} parent=11 // pred_check
          %p340 = pneg %p172
        $region22: #{tpu_custom_call.1} parent=11 // pred_check_branch
          %342 = sbr.rel (%p340) target = $region24
        $region23: #{tpu_custom_call.1} parent=11 // pred_region
          _
        $region24: #{tpu_custom_call.1} parent=11 // pred_fallthru
          _
        // Predicated region
        $region25: #{tpu_custom_call.1} parent=11 // pred_check
          %p343 = pneg %p193
        $region26: #{tpu_custom_call.1} parent=11 // pred_check_branch
          %345 = sbr.rel (%p343) target = $region28
        $region27: #{tpu_custom_call.1} parent=11 // pred_region
          _
        $region28: #{tpu_custom_call.1} parent=11 // pred_fallthru
          _
        // Predicated region
        $region29: #{tpu_custom_call.1} parent=11 // pred_check
          %p346 = pneg %p214
        $region30: #{tpu_custom_call.1} parent=11 // pred_check_branch
          %348 = sbr.rel (%p346) target = $region32
        $region31: #{tpu_custom_call.1} parent=11 // pred_region
          %s350 = ssub.s32 2048, 2048
          %351 = vsyncadd [#allocation11], %s350
          %s352 = sshll.u32 [#allocation10], 4
          %s353 = int_to_ptr.vmem [resolvable:$true] %s352
          %358 = dma.hbm_to_vmem [thread:$0]  %s6, 2048, %s353, [#allocation11], 64, 64, 4
        $region32: #{tpu_custom_call.1} parent=11 // pred_fallthru
          _
        // Predicated region
        $region33: #{tpu_custom_call.1} parent=11 // pred_check
          %p359 = pneg %p235
        $region34: #{tpu_custom_call.1} parent=11 // pred_check_branch
          %361 = sbr.rel (%p359) target = $region36
        $region35: #{tpu_custom_call.1} parent=11 // pred_region
          _
        $region36: #{tpu_custom_call.1} parent=11 // pred_fallthru
          _
        // Predicated region
        $region37: #{tpu_custom_call.1} parent=11 // pred_check
          %p362 = pneg %p256
        $region38: #{tpu_custom_call.1} parent=11 // pred_check_branch
          %364 = sbr.rel (%p362) target = $region40
        $region39: #{tpu_custom_call.1} parent=11 // pred_region
          _
        $region40: #{tpu_custom_call.1} parent=11 // pred_fallthru
          _
        // Predicated region
        $region41: #{tpu_custom_call.1} parent=11 // pred_check
          %p365 = pneg %p277
        $region42: #{tpu_custom_call.1} parent=11 // pred_check_branch
          %367 = sbr.rel (%p365) target = $region44
        $region43: #{tpu_custom_call.1} parent=11 // pred_region
          _
        $region44: #{tpu_custom_call.1} parent=11 // pred_fallthru
          _
      $region12: #{tpu_custom_call.1} parent=5 // pred_fallthru
        _
      %p368 = scmp.lt.s32.totalorder %s26, 12
      // Predicated region
      $region45: #{tpu_custom_call.1} parent=5 // pred_check
        %p369 = pneg %p368
      $region46: #{tpu_custom_call.1} parent=5 // pred_check_branch
        %371 = sbr.rel (%p369) target = $region48
      $region47: #{tpu_custom_call.1} parent=5 // pred_region
        // Predicated region
        $region49: #{tpu_custom_call.1} parent=47 // pred_check
          %p372 = pneg %p71
        $region50: #{tpu_custom_call.1} parent=47 // pred_check_branch
          %374 = sbr.rel (%p372) target = $region52
        $region51: #{tpu_custom_call.1} parent=47 // pred_region
          %s375 = sand.u32 %s61, 1
          %s376 = scalar_lea.sflag [#allocation5], %s375
          %s377 = sand.u32 %s61, 1
          %s378 = smul.addr %s377, 80
          %s379 = scalar_lea.vmem [#allocation4], %s378
          %p380 = scmp.eq.s32.totalorder %s34, 0
          %s381 = scalar_select %p380, %s35, 0
          %s382 = smul.u32 2, %s381
          %s384 = ssub.s32 1280, 1280
          %385 = vsyncadd %s376, %s384
          %s386 = smul.addr %s382, 10
          %s387 = smul.addr %s33, 20
          %s388 = sadd.s32 %s386, %s387
          %s389 = smul.addr %s388, 64
          %s390 = scalar_lea.hbm %s0, %s389
          %s391 = sshll.u32 %s379, 4
          %s392 = int_to_ptr.vmem [resolvable:$true] %s391
          %397 = dma.hbm_to_vmem [thread:$0]  %s390, 1280, %s392, %s376, 640, 640, 40
        $region52: #{tpu_custom_call.1} parent=47 // pred_fallthru
          _
        // Predicated region
        $region53: #{tpu_custom_call.1} parent=47 // pred_check
          %p398 = pneg %p103
        $region54: #{tpu_custom_call.1} parent=47 // pred_check_branch
          %400 = sbr.rel (%p398) target = $region56
        $region55: #{tpu_custom_call.1} parent=47 // pred_region
          %s401 = sand.u32 %s26, 1
          %s402 = scalar_lea.sflag [#allocation8], %s401
          %s403 = sand.u32 %s93, 1
          %s404 = smul.addr %s403, 8
          %s405 = scalar_lea.vmem [#allocation7], %s404
          %p406 = scmp.eq.s32.totalorder %s34, 0
          %s407 = scalar_select %p406, 0, %s35
          %s408 = smul.u32 2, %s407
          %s410 = ssub.s32 128, 128
          %411 = vsyncadd %s402, %s410
          %s412 = smul.addr %s33, 2
          %s413 = sadd.s32 %s408, %s412
          %s414 = smul.addr %s413, 64
          %s415 = scalar_lea.hbm %s1, %s414
          %s416 = sshll.u32 %s405, 4
          %s417 = int_to_ptr.vmem [resolvable:$true] %s416
          %422 = dma.hbm_to_vmem [thread:$0]  %s415, 128, %s417, %s402, 64, 64, 4
        $region56: #{tpu_custom_call.1} parent=47 // pred_fallthru
          _
      $region48: #{tpu_custom_call.1} parent=5 // pred_fallthru
        _
      %p423 = scmp.le.s32.totalorder 1, %s26
      %p424 = scmp.lt.s32.totalorder %s26, 13
      %p425 = pnand %p423, %p424
      %p426 = pneg %p425
      // Predicated region
      $region57: #{tpu_custom_call.1} parent=5 // pred_check
        _
      $region58: #{tpu_custom_call.1} parent=5 // pred_check_branch
        %428 = sbr.rel (%p425) target = $region60
      $region59: #{tpu_custom_call.1} parent=5 // pred_region
        %s429 = ssub.s32 %s26, 1
        %s430 = sand.u32 %s64, 1
        %s431 = scalar_lea.sflag [#allocation5], %s430
        %s432 = sand.u32 %s64, 1
        %s433 = smul.addr %s432, 80
        %s434 = scalar_lea.vmem [#allocation4], %s433
        // Predicated region
        $region61: #{tpu_custom_call.1} parent=59 // pred_check
          %p435 = pneg %p77
        $region62: #{tpu_custom_call.1} parent=59 // pred_check_branch
          %437 = sbr.rel (%p435) target = $region64
        $region63: #{tpu_custom_call.1} parent=59 // pred_region
          %438 = dma.done %s431, 1280
        $region64: #{tpu_custom_call.1} parent=59 // pred_fallthru
          _
        %s439 = sand.u32 %s31, 1
        %s440 = scalar_lea.sflag [#allocation8], %s439
        %s441 = sand.u32 %s96, 1
        %s442 = smul.addr %s441, 8
        %s443 = scalar_lea.vmem [#allocation7], %s442
        // Predicated region
        $region65: #{tpu_custom_call.1} parent=59 // pred_check
          %p444 = pneg %p109
        $region66: #{tpu_custom_call.1} parent=59 // pred_check_branch
          %446 = sbr.rel (%p444) target = $region68
        $region67: #{tpu_custom_call.1} parent=59 // pred_region
          %447 = dma.done %s440, 128
        $region68: #{tpu_custom_call.1} parent=59 // pred_fallthru
          _
        // Predicated region
        $region69: #{tpu_custom_call.1} parent=59 // pred_check
          %p448 = pneg %p130
        $region70: #{tpu_custom_call.1} parent=59 // pred_check_branch
          %450 = sbr.rel (%p448) target = $region72
        $region71: #{tpu_custom_call.1} parent=59 // pred_region
          %451 = dma.done [#allocation8], 20480
        $region72: #{tpu_custom_call.1} parent=59 // pred_fallthru
          _
        // Predicated region
        $region73: #{tpu_custom_call.1} parent=59 // pred_check
          %p452 = pneg %p214
        $region74: #{tpu_custom_call.1} parent=59 // pred_check_branch
          %454 = sbr.rel (%p452) target = $region76
        $region75: #{tpu_custom_call.1} parent=59 // pred_region
          %455 = dma.done [#allocation11], 2048
        $region76: #{tpu_custom_call.1} parent=59 // pred_fallthru
          _
        %s456 = sand.u32 %s64, 1
        %s457 = scalar_lea.sflag [#allocation5], %s456
        %s458 = sand.u32 %s64, 1
        %s459 = smul.addr %s458, 80
        %s460 = scalar_lea.vmem [#allocation4], %s459
        %p461 = pneg %p77
        %p462 = pneg %p74
        %s463 = sand.u32 %s31, 1
        %s464 = scalar_lea.sflag [#allocation8], %s463
        %s465 = sand.u32 %s96, 1
        %s466 = smul.addr %s465, 8
        %s467 = scalar_lea.vmem [#allocation7], %s466
        %p468 = pneg %p109
        %p469 = pneg %p106
        %p470 = pneg %p130
        %p471 = pneg %p127
        %p472 = pneg %p151
        %p473 = pneg %p148
        %p474 = pneg %p172
        %p475 = pneg %p169
        %p476 = pneg %p193
        %p477 = pneg %p190
        %p478 = pneg %p214
        %p479 = pneg %p211
        %p480 = pneg %p235
        %p481 = pneg %p232
        %p482 = pneg %p256
        %p483 = pneg %p253
        %p484 = pneg %p277
        %p485 = pneg %p274
        %p486 = pneg %p309
        %p487 = pneg %p306
        %s488 = sand.u32 %s296, 1
        %s489 = scalar_lea.sflag [#allocation6], %s488
        %s490 = sand.u32 %s296, 1
        %s491 = smul.addr %s490, 8
        %s492 = scalar_lea.vmem [#allocation12], %s491
        %p493 = scmp.eq.s32.totalorder %s37, 0
        %s494 = scalar_select %p493, %s38, 0
        %s495 = smul.u32 2, %s494
        %p496 = scmp.eq.s32.totalorder %s37, 0
        %s497 = scalar_select %p496, 0, %s38
        %s498 = smul.u32 2, %s497
        %p499 = scmp.eq.s32.totalorder %s37, 2
        %s500 = scalar_select %p499, %s38, 0
        %s501 = smul.u32 2, %s500
        %s503 = smul.u32 %s38, 16
        %p504 = scmp.eq.s32.totalorder %s37, 0
        // Predicated region
        $region77: #{tpu_custom_call.1} parent=59 // pred_check
          %p505 = pneg %p504
        $region78: #{tpu_custom_call.1} parent=59 // pred_check_branch
          %507 = sbr.rel (%p505) target = $region80
        $region79: #{tpu_custom_call.1} parent=59 // pred_region
          %v508 = vld [vmem:[%s434] sm:$0xff]
          %v509 = vld [vmem:[%s434 + $0x8] sm:$0xff]
          %v510 = vld [vmem:[%s434 + $0x10] sm:$0xff]
          %v511 = vld [vmem:[%s434 + $0x18] sm:$0xff]
          %v512 = vld [vmem:[%s434 + $0x20] sm:$0xff]
          %v513 = vld [vmem:[%s434 + $0x28] sm:$0xff]
          %v514 = vld [vmem:[%s434 + $0x30] sm:$0xff]
          %v515 = vld [vmem:[%s434 + $0x38] sm:$0xff]
          %v516 = vld [vmem:[%s434 + $0x40] sm:$0xff]
          %v517 = vld [vmem:[%s434 + $0x48] sm:$0xff]
          %v518 = vld [vmem:[#allocation9] sm:$0xff]
          %v519 = vld [vmem:[#allocation9 + $0x8] sm:$0xff]
          %v520 = vld [vmem:[#allocation9 + $0x10] sm:$0xff]
          %v521 = vld [vmem:[#allocation9 + $0x18] sm:$0xff]
          %v522 = vld [vmem:[#allocation9 + $0x20] sm:$0xff]
          %v523 = vld [vmem:[#allocation9 + $0x28] sm:$0xff]
          %v524 = vld [vmem:[#allocation9 + $0x30] sm:$0xff]
          %v525 = vld [vmem:[#allocation9 + $0x38] sm:$0xff]
          %v526 = vld [vmem:[#allocation9 + $0x40] sm:$0xff]
          %v527 = vld [vmem:[#allocation9 + $0x48] sm:$0xff]
          %v528 = vld [vmem:[#allocation9 + $0x50] sm:$0xff]
          %v529 = vld [vmem:[#allocation9 + $0x58] sm:$0xff]
          %v530 = vld [vmem:[#allocation9 + $0x60] sm:$0xff]
          %v531 = vld [vmem:[#allocation9 + $0x68] sm:$0xff]
          %v532 = vld [vmem:[#allocation9 + $0x70] sm:$0xff]
          %v533 = vld [vmem:[#allocation9 + $0x78] sm:$0xff]
          %v534 = vld [vmem:[#allocation9 + $0x80] sm:$0xff]
          %v535 = vld [vmem:[#allocation9 + $0x88] sm:$0xff]
          %v536 = vld [vmem:[#allocation9 + $0x90] sm:$0xff]
          %v537 = vld [vmem:[#allocation9 + $0x98] sm:$0xff]
          %v538 = vld [vmem:[#allocation9 + $0xa0] sm:$0xff]
          %v539 = vld [vmem:[#allocation9 + $0xa8] sm:$0xff]
          %v540 = vld [vmem:[#allocation9 + $0xb0] sm:$0xff]
          %v541 = vld [vmem:[#allocation9 + $0xb8] sm:$0xff]
          %v542 = vld [vmem:[#allocation9 + $0xc0] sm:$0xff]
          %v543 = vld [vmem:[#allocation9 + $0xc8] sm:$0xff]
          %v544 = vld [vmem:[#allocation9 + $0xd0] sm:$0xff]
          %v545 = vld [vmem:[#allocation9 + $0xd8] sm:$0xff]
          %v546 = vld [vmem:[#allocation9 + $0xe0] sm:$0xff]
          %v547 = vld [vmem:[#allocation9 + $0xe8] sm:$0xff]
          %v548 = vld [vmem:[#allocation9 + $0xf0] sm:$0xff]
          %v549 = vld [vmem:[#allocation9 + $0xf8] sm:$0xff]
          %v550 = vld [vmem:[#allocation9 + $0x100] sm:$0xff]
          %v551 = vld [vmem:[#allocation9 + $0x108] sm:$0xff]
          %v552 = vld [vmem:[#allocation9 + $0x110] sm:$0xff]
          %v553 = vld [vmem:[#allocation9 + $0x118] sm:$0xff]
          %v554 = vld [vmem:[#allocation9 + $0x120] sm:$0xff]
          %v555 = vld [vmem:[#allocation9 + $0x128] sm:$0xff]
          %v556 = vld [vmem:[#allocation9 + $0x130] sm:$0xff]
          %v557 = vld [vmem:[#allocation9 + $0x138] sm:$0xff]
          %v558 = vld [vmem:[#allocation9 + $0x140] sm:$0xff]
          %v559 = vld [vmem:[#allocation9 + $0x148] sm:$0xff]
          %v560 = vld [vmem:[#allocation9 + $0x150] sm:$0xff]
          %v561 = vld [vmem:[#allocation9 + $0x158] sm:$0xff]
          %v562 = vld [vmem:[#allocation9 + $0x160] sm:$0xff]
          %v563 = vld [vmem:[#allocation9 + $0x168] sm:$0xff]
          %v564 = vld [vmem:[#allocation9 + $0x170] sm:$0xff]
          %v565 = vld [vmem:[#allocation9 + $0x178] sm:$0xff]
          %v566 = vld [vmem:[#allocation9 + $0x180] sm:$0xff]
          %v567 = vld [vmem:[#allocation9 + $0x188] sm:$0xff]
          %v568 = vld [vmem:[#allocation9 + $0x190] sm:$0xff]
          %v569 = vld [vmem:[#allocation9 + $0x198] sm:$0xff]
          %v570 = vld [vmem:[#allocation9 + $0x1a0] sm:$0xff]
          %v571 = vld [vmem:[#allocation9 + $0x1a8] sm:$0xff]
          %v572 = vld [vmem:[#allocation9 + $0x1b0] sm:$0xff]
          %v573 = vld [vmem:[#allocation9 + $0x1b8] sm:$0xff]
          %v574 = vld [vmem:[#allocation9 + $0x1c0] sm:$0xff]
          %v575 = vld [vmem:[#allocation9 + $0x1c8] sm:$0xff]
          %v576 = vld [vmem:[#allocation9 + $0x1d0] sm:$0xff]
          %v577 = vld [vmem:[#allocation9 + $0x1d8] sm:$0xff]
          %v578 = vld [vmem:[#allocation9 + $0x1e0] sm:$0xff]
          %v579 = vld [vmem:[#allocation9 + $0x1e8] sm:$0xff]
          %v580 = vld [vmem:[#allocation9 + $0x1f0] sm:$0xff]
          %v581 = vld [vmem:[#allocation9 + $0x1f8] sm:$0xff]
          %v582 = vld [vmem:[#allocation9 + $0x200] sm:$0xff]
          %v583 = vld [vmem:[#allocation9 + $0x208] sm:$0xff]
          %v584 = vld [vmem:[#allocation9 + $0x210] sm:$0xff]
          %v585 = vld [vmem:[#allocation9 + $0x218] sm:$0xff]
          %v586 = vld [vmem:[#allocation9 + $0x220] sm:$0xff]
          %v587 = vld [vmem:[#allocation9 + $0x228] sm:$0xff]
          %v588 = vld [vmem:[#allocation9 + $0x230] sm:$0xff]
          %v589 = vld [vmem:[#allocation9 + $0x238] sm:$0xff]
          %v590 = vld [vmem:[#allocation9 + $0x240] sm:$0xff]
          %v591 = vld [vmem:[#allocation9 + $0x248] sm:$0xff]
          %v592 = vld [vmem:[#allocation9 + $0x250] sm:$0xff]
          %v593 = vld [vmem:[#allocation9 + $0x258] sm:$0xff]
          %v594 = vld [vmem:[#allocation9 + $0x260] sm:$0xff]
          %v595 = vld [vmem:[#allocation9 + $0x268] sm:$0xff]
          %v596 = vld [vmem:[#allocation9 + $0x270] sm:$0xff]
          %v597 = vld [vmem:[#allocation9 + $0x278] sm:$0xff]
          %v598 = vld [vmem:[#allocation9 + $0x280] sm:$0xff]
          %v599 = vld [vmem:[#allocation9 + $0x288] sm:$0xff]
          %v600 = vld [vmem:[#allocation9 + $0x290] sm:$0xff]
          %v601 = vld [vmem:[#allocation9 + $0x298] sm:$0xff]
          %v602 = vld [vmem:[#allocation9 + $0x2a0] sm:$0xff]
          %v603 = vld [vmem:[#allocation9 + $0x2a8] sm:$0xff]
          %v604 = vld [vmem:[#allocation9 + $0x2b0] sm:$0xff]
          %v605 = vld [vmem:[#allocation9 + $0x2b8] sm:$0xff]
          %v606 = vld [vmem:[#allocation9 + $0x2c0] sm:$0xff]
          %v607 = vld [vmem:[#allocation9 + $0x2c8] sm:$0xff]
          %v608 = vld [vmem:[#allocation9 + $0x2d0] sm:$0xff]
          %v609 = vld [vmem:[#allocation9 + $0x2d8] sm:$0xff]
          %v610 = vld [vmem:[#allocation9 + $0x2e0] sm:$0xff]
          %v611 = vld [vmem:[#allocation9 + $0x2e8] sm:$0xff]
          %v612 = vld [vmem:[#allocation9 + $0x2f0] sm:$0xff]
          %v613 = vld [vmem:[#allocation9 + $0x2f8] sm:$0xff]
          %v614 = vld [vmem:[#allocation9 + $0x300] sm:$0xff]
          %v615 = vld [vmem:[#allocation9 + $0x308] sm:$0xff]
          %v616 = vld [vmem:[#allocation9 + $0x310] sm:$0xff]
          %v617 = vld [vmem:[#allocation9 + $0x318] sm:$0xff]
          %v618 = vld [vmem:[#allocation9 + $0x320] sm:$0xff]
          %v619 = vld [vmem:[#allocation9 + $0x328] sm:$0xff]
          %v620 = vld [vmem:[#allocation9 + $0x330] sm:$0xff]
          %v621 = vld [vmem:[#allocation9 + $0x338] sm:$0xff]
          %v622 = vld [vmem:[#allocation9 + $0x340] sm:$0xff]
          %v623 = vld [vmem:[#allocation9 + $0x348] sm:$0xff]
          %v624 = vld [vmem:[#allocation9 + $0x350] sm:$0xff]
          %v625 = vld [vmem:[#allocation9 + $0x358] sm:$0xff]
          %v626 = vld [vmem:[#allocation9 + $0x360] sm:$0xff]
          %v627 = vld [vmem:[#allocation9 + $0x368] sm:$0xff]
          %v628 = vld [vmem:[#allocation9 + $0x370] sm:$0xff]
          %v629 = vld [vmem:[#allocation9 + $0x378] sm:$0xff]
          %v630 = vld [vmem:[#allocation9 + $0x380] sm:$0xff]
          %v631 = vld [vmem:[#allocation9 + $0x388] sm:$0xff]
          %v632 = vld [vmem:[#allocation9 + $0x390] sm:$0xff]
          %v633 = vld [vmem:[#allocation9 + $0x398] sm:$0xff]
          %v634 = vld [vmem:[#allocation9 + $0x3a0] sm:$0xff]
          %v635 = vld [vmem:[#allocation9 + $0x3a8] sm:$0xff]
          %v636 = vld [vmem:[#allocation9 + $0x3b0] sm:$0xff]
          %v637 = vld [vmem:[#allocation9 + $0x3b8] sm:$0xff]
          %v638 = vld [vmem:[#allocation9 + $0x3c0] sm:$0xff]
          %v639 = vld [vmem:[#allocation9 + $0x3c8] sm:$0xff]
          %v640 = vld [vmem:[#allocation9 + $0x3d0] sm:$0xff]
          %v641 = vld [vmem:[#allocation9 + $0x3d8] sm:$0xff]
          %v642 = vld [vmem:[#allocation9 + $0x3e0] sm:$0xff]
          %v643 = vld [vmem:[#allocation9 + $0x3e8] sm:$0xff]
          %v644 = vld [vmem:[#allocation9 + $0x3f0] sm:$0xff]
          %v645 = vld [vmem:[#allocation9 + $0x3f8] sm:$0xff]
          %v646 = vld [vmem:[#allocation9 + $0x400] sm:$0xff]
          %v647 = vld [vmem:[#allocation9 + $0x408] sm:$0xff]
          %v648 = vld [vmem:[#allocation9 + $0x410] sm:$0xff]
          %v649 = vld [vmem:[#allocation9 + $0x418] sm:$0xff]
          %v650 = vld [vmem:[#allocation9 + $0x420] sm:$0xff]
          %v651 = vld [vmem:[#allocation9 + $0x428] sm:$0xff]
          %v652 = vld [vmem:[#allocation9 + $0x430] sm:$0xff]
          %v653 = vld [vmem:[#allocation9 + $0x438] sm:$0xff]
          %v654 = vld [vmem:[#allocation9 + $0x440] sm:$0xff]
          %v655 = vld [vmem:[#allocation9 + $0x448] sm:$0xff]
          %v656 = vld [vmem:[#allocation9 + $0x450] sm:$0xff]
          %v657 = vld [vmem:[#allocation9 + $0x458] sm:$0xff]
          %v658 = vld [vmem:[#allocation9 + $0x460] sm:$0xff]
          %v659 = vld [vmem:[#allocation9 + $0x468] sm:$0xff]
          %v660 = vld [vmem:[#allocation9 + $0x470] sm:$0xff]
          %v661 = vld [vmem:[#allocation9 + $0x478] sm:$0xff]
          %v662 = vld [vmem:[#allocation9 + $0x480] sm:$0xff]
          %v663 = vld [vmem:[#allocation9 + $0x488] sm:$0xff]
          %v664 = vld [vmem:[#allocation9 + $0x490] sm:$0xff]
          %v665 = vld [vmem:[#allocation9 + $0x498] sm:$0xff]
          %v666 = vld [vmem:[#allocation9 + $0x4a0] sm:$0xff]
          %v667 = vld [vmem:[#allocation9 + $0x4a8] sm:$0xff]
          %v668 = vld [vmem:[#allocation9 + $0x4b0] sm:$0xff]
          %v669 = vld [vmem:[#allocation9 + $0x4b8] sm:$0xff]
          %v670 = vld [vmem:[#allocation9 + $0x4c0] sm:$0xff]
          %v671 = vld [vmem:[#allocation9 + $0x4c8] sm:$0xff]
          %v672 = vld [vmem:[#allocation9 + $0x4d0] sm:$0xff]
          %v673 = vld [vmem:[#allocation9 + $0x4d8] sm:$0xff]
          %v674 = vld [vmem:[#allocation9 + $0x4e0] sm:$0xff]
          %v675 = vld [vmem:[#allocation9 + $0x4e8] sm:$0xff]
          %v676 = vld [vmem:[#allocation9 + $0x4f0] sm:$0xff]
          %v677 = vld [vmem:[#allocation9 + $0x4f8] sm:$0xff]
          %v688 = vunpack.c.l.b16 %v508
          %v689 = vunpack.c.h.b16 %v508
          %v690 = vunpack.c.l.b16 %v509
          %v691 = vunpack.c.h.b16 %v509
          %v692 = vunpack.c.l.b16 %v510
          %v693 = vunpack.c.h.b16 %v510
          %v694 = vunpack.c.l.b16 %v511
          %v695 = vunpack.c.h.b16 %v511
          %v696 = vunpack.c.l.b16 %v512
          %v697 = vunpack.c.h.b16 %v512
          %v698 = vunpack.c.l.b16 %v513
          %v699 = vunpack.c.h.b16 %v513
          %v700 = vunpack.c.l.b16 %v514
          %v701 = vunpack.c.h.b16 %v514
          %v702 = vunpack.c.l.b16 %v515
          %v703 = vunpack.c.h.b16 %v515
          %v704 = vunpack.c.l.b16 %v516
          %v705 = vunpack.c.h.b16 %v516
          %v706 = vunpack.c.l.b16 %v517
          %v707 = vunpack.c.h.b16 %v517
          %v708 = vpack.c.b16 %v698, %v688
          %v709 = vpack.c.b16 %v699, %v689
          %v710 = vpack.c.b16 %v700, %v690
          %v711 = vpack.c.b16 %v701, %v691
          %v712 = vpack.c.b16 %v702, %v692
          %v713 = vpack.c.b16 %v703, %v693
          %v714 = vpack.c.b16 %v704, %v694
          %v715 = vpack.c.b16 %v705, %v695
          %v716 = vpack.c.b16 %v706, %v696
          %v717 = vpack.c.b16 %v707, %v697
          %v888 = vunpack.c.l.b16 %v518
          %v889 = vunpack.c.h.b16 %v518
          %v890 = vunpack.c.l.b16 %v519
          %v891 = vunpack.c.h.b16 %v519
          %v892 = vunpack.c.l.b16 %v520
          %v893 = vunpack.c.h.b16 %v520
          %v894 = vunpack.c.l.b16 %v521
          %v895 = vunpack.c.h.b16 %v521
          %v896 = vunpack.c.l.b16 %v522
          %v897 = vunpack.c.h.b16 %v522
          %v898 = vunpack.c.l.b16 %v523
          %v899 = vunpack.c.h.b16 %v523
          %v900 = vunpack.c.l.b16 %v524
          %v901 = vunpack.c.h.b16 %v524
          %v902 = vunpack.c.l.b16 %v525
          %v903 = vunpack.c.h.b16 %v525
          %v904 = vunpack.c.l.b16 %v526
          %v905 = vunpack.c.h.b16 %v526
          %v906 = vunpack.c.l.b16 %v527
          %v907 = vunpack.c.h.b16 %v527
          %v908 = vunpack.c.l.b16 %v528
          %v909 = vunpack.c.h.b16 %v528
          %v910 = vunpack.c.l.b16 %v529
          %v911 = vunpack.c.h.b16 %v529
          %v912 = vunpack.c.l.b16 %v530
          %v913 = vunpack.c.h.b16 %v530
          %v914 = vunpack.c.l.b16 %v531
          %v915 = vunpack.c.h.b16 %v531
          %v916 = vunpack.c.l.b16 %v532
          %v917 = vunpack.c.h.b16 %v532
          %v918 = vunpack.c.l.b16 %v533
          %v919 = vunpack.c.h.b16 %v533
          %v920 = vunpack.c.l.b16 %v534
          %v921 = vunpack.c.h.b16 %v534
          %v922 = vunpack.c.l.b16 %v535
          %v923 = vunpack.c.h.b16 %v535
          %v924 = vunpack.c.l.b16 %v536
          %v925 = vunpack.c.h.b16 %v536
          %v926 = vunpack.c.l.b16 %v537
          %v927 = vunpack.c.h.b16 %v537
          %v928 = vunpack.c.l.b16 %v538
          %v929 = vunpack.c.h.b16 %v538
          %v930 = vunpack.c.l.b16 %v539
          %v931 = vunpack.c.h.b16 %v539
          %v932 = vunpack.c.l.b16 %v540
          %v933 = vunpack.c.h.b16 %v540
          %v934 = vunpack.c.l.b16 %v541
          %v935 = vunpack.c.h.b16 %v541
          %v936 = vunpack.c.l.b16 %v542
          %v937 = vunpack.c.h.b16 %v542
          %v938 = vunpack.c.l.b16 %v543
          %v939 = vunpack.c.h.b16 %v543
          %v940 = vunpack.c.l.b16 %v544
          %v941 = vunpack.c.h.b16 %v544
          %v942 = vunpack.c.l.b16 %v545
          %v943 = vunpack.c.h.b16 %v545
          %v944 = vunpack.c.l.b16 %v546
          %v945 = vunpack.c.h.b16 %v546
          %v946 = vunpack.c.l.b16 %v547
          %v947 = vunpack.c.h.b16 %v547
          %v948 = vunpack.c.l.b16 %v548
          %v949 = vunpack.c.h.b16 %v548
          %v950 = vunpack.c.l.b16 %v549
          %v951 = vunpack.c.h.b16 %v549
          %v952 = vunpack.c.l.b16 %v550
          %v953 = vunpack.c.h.b16 %v550
          %v954 = vunpack.c.l.b16 %v551
          %v955 = vunpack.c.h.b16 %v551
          %v956 = vunpack.c.l.b16 %v552
          %v957 = vunpack.c.h.b16 %v552
          %v958 = vunpack.c.l.b16 %v553
          %v959 = vunpack.c.h.b16 %v553
          %v960 = vunpack.c.l.b16 %v554
          %v961 = vunpack.c.h.b16 %v554
          %v962 = vunpack.c.l.b16 %v555
          %v963 = vunpack.c.h.b16 %v555
          %v964 = vunpack.c.l.b16 %v556
          %v965 = vunpack.c.h.b16 %v556
          %v966 = vunpack.c.l.b16 %v557
          %v967 = vunpack.c.h.b16 %v557
          %v968 = vunpack.c.l.b16 %v558
          %v969 = vunpack.c.h.b16 %v558
          %v970 = vunpack.c.l.b16 %v559
          %v971 = vunpack.c.h.b16 %v559
          %v972 = vunpack.c.l.b16 %v560
          %v973 = vunpack.c.h.b16 %v560
          %v974 = vunpack.c.l.b16 %v561
          %v975 = vunpack.c.h.b16 %v561
          %v976 = vunpack.c.l.b16 %v562
          %v977 = vunpack.c.h.b16 %v562
          %v978 = vunpack.c.l.b16 %v563
          %v979 = vunpack.c.h.b16 %v563
          %v980 = vunpack.c.l.b16 %v564
          %v981 = vunpack.c.h.b16 %v564
          %v982 = vunpack.c.l.b16 %v565
          %v983 = vunpack.c.h.b16 %v565
          %v984 = vunpack.c.l.b16 %v566
          %v985 = vunpack.c.h.b16 %v566
          %v986 = vunpack.c.l.b16 %v567
          %v987 = vunpack.c.h.b16 %v567
          %v988 = vunpack.c.l.b16 %v568
          %v989 = vunpack.c.h.b16 %v568
          %v990 = vunpack.c.l.b16 %v569
          %v991 = vunpack.c.h.b16 %v569
          %v992 = vunpack.c.l.b16 %v570
          %v993 = vunpack.c.h.b16 %v570
          %v994 = vunpack.c.l.b16 %v571
          %v995 = vunpack.c.h.b16 %v571
          %v996 = vunpack.c.l.b16 %v572
          %v997 = vunpack.c.h.b16 %v572
          %v998 = vunpack.c.l.b16 %v573
          %v999 = vunpack.c.h.b16 %v573
          %v1000 = vunpack.c.l.b16 %v574
          %v1001 = vunpack.c.h.b16 %v574
          %v1002 = vunpack.c.l.b16 %v575
          %v1003 = vunpack.c.h.b16 %v575
          %v1004 = vunpack.c.l.b16 %v576
          %v1005 = vunpack.c.h.b16 %v576
          %v1006 = vunpack.c.l.b16 %v577
          %v1007 = vunpack.c.h.b16 %v577
          %v1008 = vunpack.c.l.b16 %v578
          %v1009 = vunpack.c.h.b16 %v578
          %v1010 = vunpack.c.l.b16 %v579
          %v1011 = vunpack.c.h.b16 %v579
          %v1012 = vunpack.c.l.b16 %v580
          %v1013 = vunpack.c.h.b16 %v580
          %v1014 = vunpack.c.l.b16 %v581
          %v1015 = vunpack.c.h.b16 %v581
          %v1016 = vunpack.c.l.b16 %v582
          %v1017 = vunpack.c.h.b16 %v582
          %v1018 = vunpack.c.l.b16 %v583
          %v1019 = vunpack.c.h.b16 %v583
          %v1020 = vunpack.c.l.b16 %v584
          %v1021 = vunpack.c.h.b16 %v584
          %v1022 = vunpack.c.l.b16 %v585
          %v1023 = vunpack.c.h.b16 %v585
          %v1024 = vunpack.c.l.b16 %v586
          %v1025 = vunpack.c.h.b16 %v586
          %v1026 = vunpack.c.l.b16 %v587
          %v1027 = vunpack.c.h.b16 %v587
          %v1028 = vunpack.c.l.b16 %v588
          %v1029 = vunpack.c.h.b16 %v588
          %v1030 = vunpack.c.l.b16 %v589
          %v1031 = vunpack.c.h.b16 %v589
          %v1032 = vunpack.c.l.b16 %v590
          %v1033 = vunpack.c.h.b16 %v590
          %v1034 = vunpack.c.l.b16 %v591
          %v1035 = vunpack.c.h.b16 %v591
          %v1036 = vunpack.c.l.b16 %v592
          %v1037 = vunpack.c.h.b16 %v592
          %v1038 = vunpack.c.l.b16 %v593
          %v1039 = vunpack.c.h.b16 %v593
          %v1040 = vunpack.c.l.b16 %v594
          %v1041 = vunpack.c.h.b16 %v594
          %v1042 = vunpack.c.l.b16 %v595
          %v1043 = vunpack.c.h.b16 %v595
          %v1044 = vunpack.c.l.b16 %v596
          %v1045 = vunpack.c.h.b16 %v596
          %v1046 = vunpack.c.l.b16 %v597
          %v1047 = vunpack.c.h.b16 %v597
          %v1048 = vunpack.c.l.b16 %v598
          %v1049 = vunpack.c.h.b16 %v598
          %v1050 = vunpack.c.l.b16 %v599
          %v1051 = vunpack.c.h.b16 %v599
          %v1052 = vunpack.c.l.b16 %v600
          %v1053 = vunpack.c.h.b16 %v600
          %v1054 = vunpack.c.l.b16 %v601
          %v1055 = vunpack.c.h.b16 %v601
          %v1056 = vunpack.c.l.b16 %v602
          %v1057 = vunpack.c.h.b16 %v602
          %v1058 = vunpack.c.l.b16 %v603
          %v1059 = vunpack.c.h.b16 %v603
          %v1060 = vunpack.c.l.b16 %v604
          %v1061 = vunpack.c.h.b16 %v604
          %v1062 = vunpack.c.l.b16 %v605
          %v1063 = vunpack.c.h.b16 %v605
          %v1064 = vunpack.c.l.b16 %v606
          %v1065 = vunpack.c.h.b16 %v606
          %v1066 = vunpack.c.l.b16 %v607
          %v1067 = vunpack.c.h.b16 %v607
          %v1068 = vunpack.c.l.b16 %v608
          %v1069 = vunpack.c.h.b16 %v608
          %v1070 = vunpack.c.l.b16 %v609
          %v1071 = vunpack.c.h.b16 %v609
          %v1072 = vunpack.c.l.b16 %v610
          %v1073 = vunpack.c.h.b16 %v610
          %v1074 = vunpack.c.l.b16 %v611
          %v1075 = vunpack.c.h.b16 %v611
          %v1076 = vunpack.c.l.b16 %v612
          %v1077 = vunpack.c.h.b16 %v612
          %v1078 = vunpack.c.l.b16 %v613
          %v1079 = vunpack.c.h.b16 %v613
          %v1080 = vunpack.c.l.b16 %v614
          %v1081 = vunpack.c.h.b16 %v614
          %v1082 = vunpack.c.l.b16 %v615
          %v1083 = vunpack.c.h.b16 %v615
          %v1084 = vunpack.c.l.b16 %v616
          %v1085 = vunpack.c.h.b16 %v616
          %v1086 = vunpack.c.l.b16 %v617
          %v1087 = vunpack.c.h.b16 %v617
          %v1088 = vunpack.c.l.b16 %v618
          %v1089 = vunpack.c.h.b16 %v618
          %v1090 = vunpack.c.l.b16 %v619
          %v1091 = vunpack.c.h.b16 %v619
          %v1092 = vunpack.c.l.b16 %v620
          %v1093 = vunpack.c.h.b16 %v620
          %v1094 = vunpack.c.l.b16 %v621
          %v1095 = vunpack.c.h.b16 %v621
          %v1096 = vunpack.c.l.b16 %v622
          %v1097 = vunpack.c.h.b16 %v622
          %v1098 = vunpack.c.l.b16 %v623
          %v1099 = vunpack.c.h.b16 %v623
          %v1100 = vunpack.c.l.b16 %v624
          %v1101 = vunpack.c.h.b16 %v624
          %v1102 = vunpack.c.l.b16 %v625
          %v1103 = vunpack.c.h.b16 %v625
          %v1104 = vunpack.c.l.b16 %v626
          %v1105 = vunpack.c.h.b16 %v626
          %v1106 = vunpack.c.l.b16 %v627
          %v1107 = vunpack.c.h.b16 %v627
          %v1108 = vunpack.c.l.b16 %v628
          %v1109 = vunpack.c.h.b16 %v628
          %v1110 = vunpack.c.l.b16 %v629
          %v1111 = vunpack.c.h.b16 %v629
          %v1112 = vunpack.c.l.b16 %v630
          %v1113 = vunpack.c.h.b16 %v630
          %v1114 = vunpack.c.l.b16 %v631
          %v1115 = vunpack.c.h.b16 %v631
          %v1116 = vunpack.c.l.b16 %v632
          %v1117 = vunpack.c.h.b16 %v632
          %v1118 = vunpack.c.l.b16 %v633
          %v1119 = vunpack.c.h.b16 %v633
          %v1120 = vunpack.c.l.b16 %v634
          %v1121 = vunpack.c.h.b16 %v634
          %v1122 = vunpack.c.l.b16 %v635
          %v1123 = vunpack.c.h.b16 %v635
          %v1124 = vunpack.c.l.b16 %v636
          %v1125 = vunpack.c.h.b16 %v636
          %v1126 = vunpack.c.l.b16 %v637
          %v1127 = vunpack.c.h.b16 %v637
          %v1128 = vunpack.c.l.b16 %v638
          %v1129 = vunpack.c.h.b16 %v638
          %v1130 = vunpack.c.l.b16 %v639
          %v1131 = vunpack.c.h.b16 %v639
          %v1132 = vunpack.c.l.b16 %v640
          %v1133 = vunpack.c.h.b16 %v640
          %v1134 = vunpack.c.l.b16 %v641
          %v1135 = vunpack.c.h.b16 %v641
          %v1136 = vunpack.c.l.b16 %v642
          %v1137 = vunpack.c.h.b16 %v642
          %v1138 = vunpack.c.l.b16 %v643
          %v1139 = vunpack.c.h.b16 %v643
          %v1140 = vunpack.c.l.b16 %v644
          %v1141 = vunpack.c.h.b16 %v644
          %v1142 = vunpack.c.l.b16 %v645
          %v1143 = vunpack.c.h.b16 %v645
          %v1144 = vunpack.c.l.b16 %v646
          %v1145 = vunpack.c.h.b16 %v646
          %v1146 = vunpack.c.l.b16 %v647
          %v1147 = vunpack.c.h.b16 %v647
          %v1148 = vunpack.c.l.b16 %v648
          %v1149 = vunpack.c.h.b16 %v648
          %v1150 = vunpack.c.l.b16 %v649
          %v1151 = vunpack.c.h.b16 %v649
          %v1152 = vunpack.c.l.b16 %v650
          %v1153 = vunpack.c.h.b16 %v650
          %v1154 = vunpack.c.l.b16 %v651
          %v1155 = vunpack.c.h.b16 %v651
          %v1156 = vunpack.c.l.b16 %v652
          %v1157 = vunpack.c.h.b16 %v652
          %v1158 = vunpack.c.l.b16 %v653
          %v1159 = vunpack.c.h.b16 %v653
          %v1160 = vunpack.c.l.b16 %v654
          %v1161 = vunpack.c.h.b16 %v654
          %v1162 = vunpack.c.l.b16 %v655
          %v1163 = vunpack.c.h.b16 %v655
          %v1164 = vunpack.c.l.b16 %v656
          %v1165 = vunpack.c.h.b16 %v656
          %v1166 = vunpack.c.l.b16 %v657
          %v1167 = vunpack.c.h.b16 %v657
          %v1168 = vunpack.c.l.b16 %v658
          %v1169 = vunpack.c.h.b16 %v658
          %v1170 = vunpack.c.l.b16 %v659
          %v1171 = vunpack.c.h.b16 %v659
          %v1172 = vunpack.c.l.b16 %v660
          %v1173 = vunpack.c.h.b16 %v660
          %v1174 = vunpack.c.l.b16 %v661
          %v1175 = vunpack.c.h.b16 %v661
          %v1176 = vunpack.c.l.b16 %v662
          %v1177 = vunpack.c.h.b16 %v662
          %v1178 = vunpack.c.l.b16 %v663
          %v1179 = vunpack.c.h.b16 %v663
          %v1180 = vunpack.c.l.b16 %v664
          %v1181 = vunpack.c.h.b16 %v664
          %v1182 = vunpack.c.l.b16 %v665
          %v1183 = vunpack.c.h.b16 %v665
          %v1184 = vunpack.c.l.b16 %v666
          %v1185 = vunpack.c.h.b16 %v666
          %v1186 = vunpack.c.l.b16 %v667
          %v1187 = vunpack.c.h.b16 %v667
          %v1188 = vunpack.c.l.b16 %v668
          %v1189 = vunpack.c.h.b16 %v668
          %v1190 = vunpack.c.l.b16 %v669
          %v1191 = vunpack.c.h.b16 %v669
          %v1192 = vunpack.c.l.b16 %v670
          %v1193 = vunpack.c.h.b16 %v670
          %v1194 = vunpack.c.l.b16 %v671
          %v1195 = vunpack.c.h.b16 %v671
          %v1196 = vunpack.c.l.b16 %v672
          %v1197 = vunpack.c.h.b16 %v672
          %v1198 = vunpack.c.l.b16 %v673
          %v1199 = vunpack.c.h.b16 %v673
          %v1200 = vunpack.c.l.b16 %v674
          %v1201 = vunpack.c.h.b16 %v674
          %v1202 = vunpack.c.l.b16 %v675
          %v1203 = vunpack.c.h.b16 %v675
          %v1204 = vunpack.c.l.b16 %v676
          %v1205 = vunpack.c.h.b16 %v676
          %v1206 = vunpack.c.l.b16 %v677
          %v1207 = vunpack.c.h.b16 %v677
          %v1208 = vpack.c.b16 %v890, %v888
          %v1209 = vpack.c.b16 %v891, %v889
          %v1210 = vpack.c.b16 %v894, %v892
          %v1211 = vpack.c.b16 %v895, %v893
          %v1212 = vpack.c.b16 %v898, %v896
          %v1213 = vpack.c.b16 %v899, %v897
          %v1214 = vpack.c.b16 %v902, %v900
          %v1215 = vpack.c.b16 %v903, %v901
          %v1216 = vpack.c.b16 %v906, %v904
          %v1217 = vpack.c.b16 %v907, %v905
          %v1218 = vpack.c.b16 %v910, %v908
          %v1219 = vpack.c.b16 %v911, %v909
          %v1220 = vpack.c.b16 %v914, %v912
          %v1221 = vpack.c.b16 %v915, %v913
          %v1222 = vpack.c.b16 %v918, %v916
          %v1223 = vpack.c.b16 %v919, %v917
          %v1224 = vpack.c.b16 %v922, %v920
          %v1225 = vpack.c.b16 %v923, %v921
          %v1226 = vpack.c.b16 %v926, %v924
          %v1227 = vpack.c.b16 %v927, %v925
          %v1228 = vpack.c.b16 %v930, %v928
          %v1229 = vpack.c.b16 %v931, %v929
          %v1230 = vpack.c.b16 %v934, %v932
          %v1231 = vpack.c.b16 %v935, %v933
          %v1232 = vpack.c.b16 %v938, %v936
          %v1233 = vpack.c.b16 %v939, %v937
          %v1234 = vpack.c.b16 %v942, %v940
          %v1235 = vpack.c.b16 %v943, %v941
          %v1236 = vpack.c.b16 %v946, %v944
          %v1237 = vpack.c.b16 %v947, %v945
          %v1238 = vpack.c.b16 %v950, %v948
          %v1239 = vpack.c.b16 %v951, %v949
          %v1240 = vpack.c.b16 %v954, %v952
          %v1241 = vpack.c.b16 %v955, %v953
          %v1242 = vpack.c.b16 %v958, %v956
          %v1243 = vpack.c.b16 %v959, %v957
          %v1244 = vpack.c.b16 %v962, %v960
          %v1245 = vpack.c.b16 %v963, %v961
          %v1246 = vpack.c.b16 %v966, %v964
          %v1247 = vpack.c.b16 %v967, %v965
          %v1248 = vpack.c.b16 %v970, %v968
          %v1249 = vpack.c.b16 %v971, %v969
          %v1250 = vpack.c.b16 %v974, %v972
          %v1251 = vpack.c.b16 %v975, %v973
          %v1252 = vpack.c.b16 %v978, %v976
          %v1253 = vpack.c.b16 %v979, %v977
          %v1254 = vpack.c.b16 %v982, %v980
          %v1255 = vpack.c.b16 %v983, %v981
          %v1256 = vpack.c.b16 %v986, %v984
          %v1257 = vpack.c.b16 %v987, %v985
          %v1258 = vpack.c.b16 %v990, %v988
          %v1259 = vpack.c.b16 %v991, %v989
          %v1260 = vpack.c.b16 %v994, %v992
          %v1261 = vpack.c.b16 %v995, %v993
          %v1262 = vpack.c.b16 %v998, %v996
          %v1263 = vpack.c.b16 %v999, %v997
          %v1264 = vpack.c.b16 %v1002, %v1000
          %v1265 = vpack.c.b16 %v1003, %v1001
          %v1266 = vpack.c.b16 %v1006, %v1004
          %v1267 = vpack.c.b16 %v1007, %v1005
          %v1268 = vpack.c.b16 %v1010, %v1008
          %v1269 = vpack.c.b16 %v1011, %v1009
          %v1270 = vpack.c.b16 %v1014, %v1012
          %v1271 = vpack.c.b16 %v1015, %v1013
          %v1272 = vpack.c.b16 %v1018, %v1016
          %v1273 = vpack.c.b16 %v1019, %v1017
          %v1274 = vpack.c.b16 %v1022, %v1020
          %v1275 = vpack.c.b16 %v1023, %v1021
          %v1276 = vpack.c.b16 %v1026, %v1024
          %v1277 = vpack.c.b16 %v1027, %v1025
          %v1278 = vpack.c.b16 %v1030, %v1028
          %v1279 = vpack.c.b16 %v1031, %v1029
          %v1280 = vpack.c.b16 %v1034, %v1032
          %v1281 = vpack.c.b16 %v1035, %v1033
          %v1282 = vpack.c.b16 %v1038, %v1036
          %v1283 = vpack.c.b16 %v1039, %v1037
          %v1284 = vpack.c.b16 %v1042, %v1040
          %v1285 = vpack.c.b16 %v1043, %v1041
          %v1286 = vpack.c.b16 %v1046, %v1044
          %v1287 = vpack.c.b16 %v1047, %v1045
          %v1288 = vpack.c.b16 %v1050, %v1048
          %v1289 = vpack.c.b16 %v1051, %v1049
          %v1290 = vpack.c.b16 %v1054, %v1052
          %v1291 = vpack.c.b16 %v1055, %v1053
          %v1292 = vpack.c.b16 %v1058, %v1056
          %v1293 = vpack.c.b16 %v1059, %v1057
          %v1294 = vpack.c.b16 %v1062, %v1060
          %v1295 = vpack.c.b16 %v1063, %v1061
          %v1296 = vpack.c.b16 %v1066, %v1064
          %v1297 = vpack.c.b16 %v1067, %v1065
          %v1298 = vpack.c.b16 %v1070, %v1068
          %v1299 = vpack.c.b16 %v1071, %v1069
          %v1300 = vpack.c.b16 %v1074, %v1072
          %v1301 = vpack.c.b16 %v1075, %v1073
          %v1302 = vpack.c.b16 %v1078, %v1076
          %v1303 = vpack.c.b16 %v1079, %v1077
          %v1304 = vpack.c.b16 %v1082, %v1080
          %v1305 = vpack.c.b16 %v1083, %v1081
          %v1306 = vpack.c.b16 %v1086, %v1084
          %v1307 = vpack.c.b16 %v1087, %v1085
          %v1308 = vpack.c.b16 %v1090, %v1088
          %v1309 = vpack.c.b16 %v1091, %v1089
          %v1310 = vpack.c.b16 %v1094, %v1092
          %v1311 = vpack.c.b16 %v1095, %v1093
          %v1312 = vpack.c.b16 %v1098, %v1096
          %v1313 = vpack.c.b16 %v1099, %v1097
          %v1314 = vpack.c.b16 %v1102, %v1100
          %v1315 = vpack.c.b16 %v1103, %v1101
          %v1316 = vpack.c.b16 %v1106, %v1104
          %v1317 = vpack.c.b16 %v1107, %v1105
          %v1318 = vpack.c.b16 %v1110, %v1108
          %v1319 = vpack.c.b16 %v1111, %v1109
          %v1320 = vpack.c.b16 %v1114, %v1112
          %v1321 = vpack.c.b16 %v1115, %v1113
          %v1322 = vpack.c.b16 %v1118, %v1116
          %v1323 = vpack.c.b16 %v1119, %v1117
          %v1324 = vpack.c.b16 %v1122, %v1120
          %v1325 = vpack.c.b16 %v1123, %v1121
          %v1326 = vpack.c.b16 %v1126, %v1124
          %v1327 = vpack.c.b16 %v1127, %v1125
          %v1328 = vpack.c.b16 %v1130, %v1128
          %v1329 = vpack.c.b16 %v1131, %v1129
          %v1330 = vpack.c.b16 %v1134, %v1132
          %v1331 = vpack.c.b16 %v1135, %v1133
          %v1332 = vpack.c.b16 %v1138, %v1136
          %v1333 = vpack.c.b16 %v1139, %v1137
          %v1334 = vpack.c.b16 %v1142, %v1140
          %v1335 = vpack.c.b16 %v1143, %v1141
          %v1336 = vpack.c.b16 %v1146, %v1144
          %v1337 = vpack.c.b16 %v1147, %v1145
          %v1338 = vpack.c.b16 %v1150, %v1148
          %v1339 = vpack.c.b16 %v1151, %v1149
          %v1340 = vpack.c.b16 %v1154, %v1152
          %v1341 = vpack.c.b16 %v1155, %v1153
          %v1342 = vpack.c.b16 %v1158, %v1156
          %v1343 = vpack.c.b16 %v1159, %v1157
          %v1344 = vpack.c.b16 %v1162, %v1160
          %v1345 = vpack.c.b16 %v1163, %v1161
          %v1346 = vpack.c.b16 %v1166, %v1164
          %v1347 = vpack.c.b16 %v1167, %v1165
          %v1348 = vpack.c.b16 %v1170, %v1168
          %v1349 = vpack.c.b16 %v1171, %v1169
          %v1350 = vpack.c.b16 %v1174, %v1172
          %v1351 = vpack.c.b16 %v1175, %v1173
          %v1352 = vpack.c.b16 %v1178, %v1176
          %v1353 = vpack.c.b16 %v1179, %v1177
          %v1354 = vpack.c.b16 %v1182, %v1180
          %v1355 = vpack.c.b16 %v1183, %v1181
          %v1356 = vpack.c.b16 %v1186, %v1184
          %v1357 = vpack.c.b16 %v1187, %v1185
          %v1358 = vpack.c.b16 %v1190, %v1188
          %v1359 = vpack.c.b16 %v1191, %v1189
          %v1360 = vpack.c.b16 %v1194, %v1192
          %v1361 = vpack.c.b16 %v1195, %v1193
          %v1362 = vpack.c.b16 %v1198, %v1196
          %v1363 = vpack.c.b16 %v1199, %v1197
          %v1364 = vpack.c.b16 %v1202, %v1200
          %v1365 = vpack.c.b16 %v1203, %v1201
          %v1366 = vpack.c.b16 %v1206, %v1204
          %v1367 = vpack.c.b16 %v1207, %v1205
          %1528 = vmatprep.subr.bf16.mxu0 %v1209
          %1529 = vmatpush1.bf16.msra.mxu0 %v1208
          %1530 = vmatprep.subr.bf16.mxu0 %v1211
          %1531 = vmatpush1.bf16.msra.mxu0 %v1210
          %1532 = vmatprep.subr.bf16.mxu0 %v1213
          %1533 = vmatpush1.bf16.msra.mxu0 %v1212
          %1534 = vmatprep.subr.bf16.mxu0 %v1215
          %1535 = vmatpush1.bf16.msra.mxu0 %v1214
          %1536 = vmatprep.subr.bf16.mxu0 %v1217
          %1537 = vmatpush1.bf16.msra.mxu0 %v1216
          %1538 = vmatprep.subr.bf16.mxu0 %v1219
          %1539 = vmatpush1.bf16.msra.mxu0 %v1218
          %1540 = vmatprep.subr.bf16.mxu0 %v1221
          %1541 = vmatpush1.bf16.msra.mxu0 %v1220
          %1542 = vmatprep.subr.bf16.mxu0 %v1223
          %1543 = vmatpush1.bf16.msra.mxu0 %v1222
          %1544 = vmatprep.subr.bf16.mxu0 %v1225
          %1545 = vmatpush1.bf16.msra.mxu0 %v1224
          %1546 = vmatprep.subr.bf16.mxu0 %v1227
          %1547 = vmatpush1.bf16.msra.mxu0 %v1226
          %1548 = vmatprep.subr.bf16.mxu0 %v1229
          %1549 = vmatpush1.bf16.msra.mxu0 %v1228
          %1550 = vmatprep.subr.bf16.mxu0 %v1231
          %1551 = vmatpush1.bf16.msra.mxu0 %v1230
          %1552 = vmatprep.subr.bf16.mxu0 %v1233
          %1553 = vmatpush1.bf16.msra.mxu0 %v1232
          %1554 = vmatprep.subr.bf16.mxu0 %v1235
          %1555 = vmatpush1.bf16.msra.mxu0 %v1234
          %1556 = vmatprep.subr.bf16.mxu0 %v1237
          %1557 = vmatpush1.bf16.msra.mxu0 %v1236
          %1558 = vmatprep.subr.bf16.mxu0 %v1239
          %1559 = vmatpush1.bf16.msra.mxu0 %v1238
          %1560 = vmatprep.mubr.bf16.mxu0 %v709
          %1561 = vmatmul.mubr.bf16.gmra.mrb[0].mxu0 %v708
          %v1562 = vpop.f32.mrb[0].mxu0
          %v1563 = vadd.f32 0.0, %v1562
          %v1564 = vpop.f32.mrb[0].mxu0
          %v1565 = vadd.f32 0.0, %v1564
          %v1566 = vpop.f32.mrb[0].mxu0
          %v1567 = vadd.f32 0.0, %v1566
          %v1568 = vpop.f32.mrb[0].mxu0
          %v1569 = vadd.f32 0.0, %v1568
          %1570 = vdwg.mxu0
          %1571 = vmatprep.subr.bf16.mxu0 %v1241
          %1572 = vmatpush1.bf16.msra.mxu0 %v1240
          %1573 = vmatprep.subr.bf16.mxu0 %v1243
          %1574 = vmatpush1.bf16.msra.mxu0 %v1242
          %1575 = vmatprep.subr.bf16.mxu0 %v1245
          %1576 = vmatpush1.bf16.msra.mxu0 %v1244
          %1577 = vmatprep.subr.bf16.mxu0 %v1247
          %1578 = vmatpush1.bf16.msra.mxu0 %v1246
          %1579 = vmatprep.subr.bf16.mxu0 %v1249
          %1580 = vmatpush1.bf16.msra.mxu0 %v1248
          %1581 = vmatprep.subr.bf16.mxu0 %v1251
          %1582 = vmatpush1.bf16.msra.mxu0 %v1250
          %1583 = vmatprep.subr.bf16.mxu0 %v1253
          %1584 = vmatpush1.bf16.msra.mxu0 %v1252
          %1585 = vmatprep.subr.bf16.mxu0 %v1255
          %1586 = vmatpush1.bf16.msra.mxu0 %v1254
          %1587 = vmatprep.subr.bf16.mxu0 %v1257
          %1588 = vmatpush1.bf16.msra.mxu0 %v1256
          %1589 = vmatprep.subr.bf16.mxu0 %v1259
          %1590 = vmatpush1.bf16.msra.mxu0 %v1258
          %1591 = vmatprep.subr.bf16.mxu0 %v1261
          %1592 = vmatpush1.bf16.msra.mxu0 %v1260
          %1593 = vmatprep.subr.bf16.mxu0 %v1263
          %1594 = vmatpush1.bf16.msra.mxu0 %v1262
          %1595 = vmatprep.subr.bf16.mxu0 %v1265
          %1596 = vmatpush1.bf16.msra.mxu0 %v1264
          %1597 = vmatprep.subr.bf16.mxu0 %v1267
          %1598 = vmatpush1.bf16.msra.mxu0 %v1266
          %1599 = vmatprep.subr.bf16.mxu0 %v1269
          %1600 = vmatpush1.bf16.msra.mxu0 %v1268
          %1601 = vmatprep.subr.bf16.mxu0 %v1271
          %1602 = vmatpush1.bf16.msra.mxu0 %v1270
          %1603 = vmatprep.mubr.bf16.mxu0 %v711
          %1604 = vmatmul.mubr.bf16.gmra.mrb[0].mxu0 %v710
          %v1605 = vpop.f32.mrb[0].mxu0
          %v1606 = vadd.f32 %v1563, %v1605
          %v1607 = vpop.f32.mrb[0].mxu0
          %v1608 = vadd.f32 %v1565, %v1607
          %v1609 = vpop.f32.mrb[0].mxu0
          %v1610 = vadd.f32 %v1567, %v1609
          %v1611 = vpop.f32.mrb[0].mxu0
          %v1612 = vadd.f32 %v1569, %v1611
          %1613 = vdwg.mxu0
          %1614 = vmatprep.subr.bf16.mxu0 %v1273
          %1615 = vmatpush1.bf16.msra.mxu0 %v1272
          %1616 = vmatprep.subr.bf16.mxu0 %v1275
          %1617 = vmatpush1.bf16.msra.mxu0 %v1274
          %1618 = vmatprep.subr.bf16.mxu0 %v1277
          %1619 = vmatpush1.bf16.msra.mxu0 %v1276
          %1620 = vmatprep.subr.bf16.mxu0 %v1279
          %1621 = vmatpush1.bf16.msra.mxu0 %v1278
          %1622 = vmatprep.subr.bf16.mxu0 %v1281
          %1623 = vmatpush1.bf16.msra.mxu0 %v1280
          %1624 = vmatprep.subr.bf16.mxu0 %v1283
          %1625 = vmatpush1.bf16.msra.mxu0 %v1282
          %1626 = vmatprep.subr.bf16.mxu0 %v1285
          %1627 = vmatpush1.bf16.msra.mxu0 %v1284
          %1628 = vmatprep.subr.bf16.mxu0 %v1287
          %1629 = vmatpush1.bf16.msra.mxu0 %v1286
          %1630 = vmatprep.subr.bf16.mxu0 %v1289
          %1631 = vmatpush1.bf16.msra.mxu0 %v1288
          %1632 = vmatprep.subr.bf16.mxu0 %v1291
          %1633 = vmatpush1.bf16.msra.mxu0 %v1290
          %1634 = vmatprep.subr.bf16.mxu0 %v1293
          %1635 = vmatpush1.bf16.msra.mxu0 %v1292
          %1636 = vmatprep.subr.bf16.mxu0 %v1295
          %1637 = vmatpush1.bf16.msra.mxu0 %v1294
          %1638 = vmatprep.subr.bf16.mxu0 %v1297
          %1639 = vmatpush1.bf16.msra.mxu0 %v1296
          %1640 = vmatprep.subr.bf16.mxu0 %v1299
          %1641 = vmatpush1.bf16.msra.mxu0 %v1298
          %1642 = vmatprep.subr.bf16.mxu0 %v1301
          %1643 = vmatpush1.bf16.msra.mxu0 %v1300
          %1644 = vmatprep.subr.bf16.mxu0 %v1303
          %1645 = vmatpush1.bf16.msra.mxu0 %v1302
          %1646 = vmatprep.mubr.bf16.mxu0 %v713
          %1647 = vmatmul.mubr.bf16.gmra.mrb[0].mxu0 %v712
          %v1648 = vpop.f32.mrb[0].mxu0
          %v1649 = vadd.f32 %v1606, %v1648
          %v1650 = vpop.f32.mrb[0].mxu0
          %v1651 = vadd.f32 %v1608, %v1650
          %v1652 = vpop.f32.mrb[0].mxu0
          %v1653 = vadd.f32 %v1610, %v1652
          %v1654 = vpop.f32.mrb[0].mxu0
          %v1655 = vadd.f32 %v1612, %v1654
          %1656 = vdwg.mxu0
          %1657 = vmatprep.subr.bf16.mxu0 %v1305
          %1658 = vmatpush1.bf16.msra.mxu0 %v1304
          %1659 = vmatprep.subr.bf16.mxu0 %v1307
          %1660 = vmatpush1.bf16.msra.mxu0 %v1306
          %1661 = vmatprep.subr.bf16.mxu0 %v1309
          %1662 = vmatpush1.bf16.msra.mxu0 %v1308
          %1663 = vmatprep.subr.bf16.mxu0 %v1311
          %1664 = vmatpush1.bf16.msra.mxu0 %v1310
          %1665 = vmatprep.subr.bf16.mxu0 %v1313
          %1666 = vmatpush1.bf16.msra.mxu0 %v1312
          %1667 = vmatprep.subr.bf16.mxu0 %v1315
          %1668 = vmatpush1.bf16.msra.mxu0 %v1314
          %1669 = vmatprep.subr.bf16.mxu0 %v1317
          %1670 = vmatpush1.bf16.msra.mxu0 %v1316
          %1671 = vmatprep.subr.bf16.mxu0 %v1319
          %1672 = vmatpush1.bf16.msra.mxu0 %v1318
          %1673 = vmatprep.subr.bf16.mxu0 %v1321
          %1674 = vmatpush1.bf16.msra.mxu0 %v1320
          %1675 = vmatprep.subr.bf16.mxu0 %v1323
          %1676 = vmatpush1.bf16.msra.mxu0 %v1322
          %1677 = vmatprep.subr.bf16.mxu0 %v1325
          %1678 = vmatpush1.bf16.msra.mxu0 %v1324
          %1679 = vmatprep.subr.bf16.mxu0 %v1327
          %1680 = vmatpush1.bf16.msra.mxu0 %v1326
          %1681 = vmatprep.subr.bf16.mxu0 %v1329
          %1682 = vmatpush1.bf16.msra.mxu0 %v1328
          %1683 = vmatprep.subr.bf16.mxu0 %v1331
          %1684 = vmatpush1.bf16.msra.mxu0 %v1330
          %1685 = vmatprep.subr.bf16.mxu0 %v1333
          %1686 = vmatpush1.bf16.msra.mxu0 %v1332
          %1687 = vmatprep.subr.bf16.mxu0 %v1335
          %1688 = vmatpush1.bf16.msra.mxu0 %v1334
          %1689 = vmatprep.mubr.bf16.mxu0 %v715
          %1690 = vmatmul.mubr.bf16.gmra.mrb[0].mxu0 %v714
          %v1691 = vpop.f32.mrb[0].mxu0
          %v1692 = vadd.f32 %v1649, %v1691
          %v1693 = vpop.f32.mrb[0].mxu0
          %v1694 = vadd.f32 %v1651, %v1693
          %v1695 = vpop.f32.mrb[0].mxu0
          %v1696 = vadd.f32 %v1653, %v1695
          %v1697 = vpop.f32.mrb[0].mxu0
          %v1698 = vadd.f32 %v1655, %v1697
          %1699 = vdwg.mxu0
          %1700 = vmatprep.subr.bf16.mxu0 %v1337
          %1701 = vmatpush1.bf16.msra.mxu0 %v1336
          %1702 = vmatprep.subr.bf16.mxu0 %v1339
          %1703 = vmatpush1.bf16.msra.mxu0 %v1338
          %1704 = vmatprep.subr.bf16.mxu0 %v1341
          %1705 = vmatpush1.bf16.msra.mxu0 %v1340
          %1706 = vmatprep.subr.bf16.mxu0 %v1343
          %1707 = vmatpush1.bf16.msra.mxu0 %v1342
          %1708 = vmatprep.subr.bf16.mxu0 %v1345
          %1709 = vmatpush1.bf16.msra.mxu0 %v1344
          %1710 = vmatprep.subr.bf16.mxu0 %v1347
          %1711 = vmatpush1.bf16.msra.mxu0 %v1346
          %1712 = vmatprep.subr.bf16.mxu0 %v1349
          %1713 = vmatpush1.bf16.msra.mxu0 %v1348
          %1714 = vmatprep.subr.bf16.mxu0 %v1351
          %1715 = vmatpush1.bf16.msra.mxu0 %v1350
          %1716 = vmatprep.subr.bf16.mxu0 %v1353
          %1717 = vmatpush1.bf16.msra.mxu0 %v1352
          %1718 = vmatprep.subr.bf16.mxu0 %v1355
          %1719 = vmatpush1.bf16.msra.mxu0 %v1354
          %1720 = vmatprep.subr.bf16.mxu0 %v1357
          %1721 = vmatpush1.bf16.msra.mxu0 %v1356
          %1722 = vmatprep.subr.bf16.mxu0 %v1359
          %1723 = vmatpush1.bf16.msra.mxu0 %v1358
          %1724 = vmatprep.subr.bf16.mxu0 %v1361
          %1725 = vmatpush1.bf16.msra.mxu0 %v1360
          %1726 = vmatprep.subr.bf16.mxu0 %v1363
          %1727 = vmatpush1.bf16.msra.mxu0 %v1362
          %1728 = vmatprep.subr.bf16.mxu0 %v1365
          %1729 = vmatpush1.bf16.msra.mxu0 %v1364
          %1730 = vmatprep.subr.bf16.mxu0 %v1367
          %1731 = vmatpush1.bf16.msra.mxu0 %v1366
          %1732 = vmatprep.mubr.bf16.mxu0 %v717
          %1733 = vmatmul.mubr.bf16.gmra.mrb[0].mxu0 %v716
          %v1734 = vpop.f32.mrb[0].mxu0
          %v1735 = vadd.f32 %v1692, %v1734
          %v1736 = vpop.f32.mrb[0].mxu0
          %v1737 = vadd.f32 %v1694, %v1736
          %v1738 = vpop.f32.mrb[0].mxu0
          %v1739 = vadd.f32 %v1696, %v1738
          %v1740 = vpop.f32.mrb[0].mxu0
          %v1741 = vadd.f32 %v1698, %v1740
          %1742 = vdwg.mxu0
          %v1743 = vpack.c.bf16 %v1739, %v1735
          %v1744 = vpack.c.bf16 %v1741, %v1737
          %s1745 = sshra.s32 %s503, 4
          %s1746 = sand.u32 %s503, 15
          %s1747 = smul.u32 %s1745, 2
          %s1748 = smul.addr %s1747, 8
          %s1749 = scalar_lea.vmem [#allocation2], %s1748
          %1750 = vst [vmem:[%s1749] sm:$0xff] %v1743
          %1751 = vst [vmem:[%s1749 + $0x8] sm:$0xff] %v1744
        $region80: #{tpu_custom_call.1} parent=59 // pred_fallthru
          _
        %p1752 = scmp.eq.s32.totalorder %s37, 1
        // Predicated region
        $region81: #{tpu_custom_call.1} parent=59 // pred_check
          %p1753 = pneg %p1752
        $region82: #{tpu_custom_call.1} parent=59 // pred_check_branch
          %1755 = sbr.rel (%p1753) target = $region84
        $region83: #{tpu_custom_call.1} parent=59 // pred_region
          %v1756 = vld [vmem:[%s443] sm:$0xf]
          %v1757 = vld [vmem:[%s443 + $0x4] sm:$0xf]
          %v1758 = vld [vmem:[#allocation2] sm:$0xff]
          %v1759 = vld [vmem:[#allocation2 + $0x8] sm:$0xff]
          %v1760 = vld [vmem:[%s3] sm:$0x3]
          %v1762 = vlaneseq
          %v1763 = vshrl.u32 %v1762, 7
          %v1764 = vsub.s32 0, %v1763
          %v1765 = vrot.slane %v1760, %v1764
          %v1766 = vlaneseq
          %v1767 = vshrl.u32 %v1766, 7
          %v1768 = vsub.s32 1, %v1767
          %v1769 = vrot.slane %v1760, %v1768
          %v1774 = vunpack.c.l.b16 %v1756
          %v1775 = vunpack.c.l.b16 %v1757
          %v1776 = vpack.c.b16 %v1775, %v1774
          %vm1777 = vcmask 130048
          %v1779 = vsel %vm1777, %v1776, 0
          %1781 = vmatprep.subr.bf16.mxu0 %v1759
          %1782 = vmatpush1.bf16.msra.mxu0 %v1758
          %1783 = vmatprep.subr.bf16.mxu0 0
          %1784 = vmatpush1.bf16.msra.mxu0 0
          %1785 = vmatprep.subr.bf16.mxu0 0
          %1786 = vmatpush1.bf16.msra.mxu0 0
          %1787 = vmatprep.subr.bf16.mxu0 0
          %1788 = vmatpush1.bf16.msra.mxu0 0
          %1789 = vmatprep.subr.bf16.mxu0 0
          %1790 = vmatpush1.bf16.msra.mxu0 0
          %1791 = vmatprep.subr.bf16.mxu0 0
          %1792 = vmatpush1.bf16.msra.mxu0 0
          %1793 = vmatprep.subr.bf16.mxu0 0
          %1794 = vmatpush1.bf16.msra.mxu0 0
          %1795 = vmatprep.subr.bf16.mxu0 0
          %1796 = vmatpush1.bf16.msra.mxu0 0
          %1797 = vmatprep.subr.bf16.mxu0 0
          %1798 = vmatpush1.bf16.msra.mxu0 0
          %1799 = vmatprep.subr.bf16.mxu0 0
          %1800 = vmatpush1.bf16.msra.mxu0 0
          %1801 = vmatprep.subr.bf16.mxu0 0
          %1802 = vmatpush1.bf16.msra.mxu0 0
          %1803 = vmatprep.subr.bf16.mxu0 0
          %1804 = vmatpush1.bf16.msra.mxu0 0
          %1805 = vmatprep.subr.bf16.mxu0 0
          %1806 = vmatpush1.bf16.msra.mxu0 0
          %1807 = vmatprep.subr.bf16.mxu0 0
          %1808 = vmatpush1.bf16.msra.mxu0 0
          %1809 = vmatprep.subr.bf16.mxu0 0
          %1810 = vmatpush1.bf16.msra.mxu0 0
          %1811 = vmatprep.subr.bf16.mxu0 0
          %1812 = vmatpush1.bf16.msra.mxu0 0
          %1813 = vmatprep.mubr.bf16.mxu0 0
          %1814 = vmatmul.mubr.bf16.gmra.mrb[0].mxu0 %v1779
          %v1815 = vpop.f32.mrb[0].mxu0
          %v1816 = vadd.f32 %v1765, %v1815
          %v1817 = vpop.f32.mrb[0].mxu0
          %v1818 = vadd.f32 %v1769, %v1817
          %v1819 = vpop.f32.mrb[0].mxu0
          %v1820 = vadd.f32 %v1765, %v1819
          %v1821 = vpop.f32.mrb[0].mxu0
          %v1822 = vadd.f32 %v1769, %v1821
          %1823 = vdwg.mxu0
          %v1824 = vadd.f32 %v1816, %v1818
          %1825 = vadd.xlane.f32.xlu0 %v1824
          %v1826 = vpop.xlane.xlu0 %1825
          %v1827 = vadd.f32 %v1820, %v1822
          %1828 = vadd.xlane.f32.xlu0 %v1827
          %v1829 = vpop.xlane.xlu0 %1828
          %v1830 = vrcp.pop 256.0
          %v1831 = vmul.f32 %v1826, %v1830
          %v1832 = vmul.f32 %v1829, %v1830
          %v1833 = vsub.f32 %v1816, %v1831
          %v1834 = vsub.f32 %v1818, %v1831
          %v1835 = vsub.f32 %v1820, %v1832
          %v1836 = vsub.f32 %v1822, %v1832
          %v1837 = vmul.f32 %v1833, %v1833
          %v1838 = vmul.f32 %v1834, %v1834
          %v1839 = vmul.f32 %v1835, %v1835
          %v1840 = vmul.f32 %v1836, %v1836
          %v1841 = vadd.f32 %v1837, %v1838
          %1842 = vadd.xlane.f32.xlu0 %v1841
          %v1843 = vpop.xlane.xlu0 %1842
          %v1844 = vadd.f32 %v1839, %v1840
          %1845 = vadd.xlane.f32.xlu0 %v1844
          %v1846 = vpop.xlane.xlu0 %1845
          %v1847 = vmul.f32 %v1843, %v1830
          %v1848 = vmul.f32 %v1846, %v1830
          %v1849 = vadd.f32 %v1847, 1e-05
          %v1850 = vadd.f32 %v1848, 1e-05
          %v1851 = vrsqrt.pop %v1849
          %v1852 = vrsqrt.pop %v1850
          %v1853 = vmul.f32 %v1833, %v1851
          %v1854 = vmul.f32 %v1834, %v1851
          %v1855 = vmul.f32 %v1835, %v1852
          %v1856 = vmul.f32 %v1836, %v1852
          %v1857 = vld [vmem:[%s4] sm:$0x3]
          %v1859 = vlaneseq
          %v1860 = vshrl.u32 %v1859, 7
          %v1861 = vsub.s32 0, %v1860
          %v1862 = vrot.slane %v1857, %v1861
          %v1863 = vlaneseq
          %v1864 = vshrl.u32 %v1863, 7
          %v1865 = vsub.s32 1, %v1864
          %v1866 = vrot.slane %v1857, %v1865
          %v1869 = vmul.f32 %v1853, %v1862
          %v1870 = vmul.f32 %v1854, %v1866
          %v1871 = vmul.f32 %v1855, %v1862
          %v1872 = vmul.f32 %v1856, %v1866
          %v1873 = vld [vmem:[%s5] sm:$0x3]
          %v1875 = vlaneseq
          %v1876 = vshrl.u32 %v1875, 7
          %v1877 = vsub.s32 0, %v1876
          %v1878 = vrot.slane %v1873, %v1877
          %v1879 = vlaneseq
          %v1880 = vshrl.u32 %v1879, 7
          %v1881 = vsub.s32 1, %v1880
          %v1882 = vrot.slane %v1873, %v1881
          %v1885 = vadd.f32 %v1869, %v1878
          %v1886 = vadd.f32 %v1870, %v1882
          %v1887 = vadd.f32 %v1871, %v1878
          %v1888 = vadd.f32 %v1872, %v1882
          %vm1889 = vcmp.ge.f32.partialorder %v1885, 0.0
          %vm1890 = vcmp.ge.f32.partialorder %v1886, 0.0
          %vm1891 = vcmp.ge.f32.partialorder %v1887, 0.0
          %vm1892 = vcmp.ge.f32.partialorder %v1888, 0.0
          %v1893 = vmul.f32 %v1885, 0.2
          %v1894 = vmul.f32 %v1886, 0.2
          %v1895 = vmul.f32 %v1887, 0.2
          %v1896 = vmul.f32 %v1888, 0.2
          %v1897 = vsel %vm1889, %v1885, %v1893
          %v1898 = vsel %vm1890, %v1886, %v1894
          %v1899 = vsel %vm1891, %v1887, %v1895
          %v1900 = vsel %vm1892, %v1888, %v1896
          %v1901 = vpack.c.bf16 %v1899, %v1897
          %v1902 = vpack.c.bf16 %v1900, %v1898
          %v1903 = vld [vmem:[#allocation10] sm:$0xf]
          %v1904 = vld [vmem:[#allocation10 + $0x4] sm:$0xf]
          %v1905 = vld [vmem:[#allocation10 + $0x8] sm:$0xf]
          %v1906 = vld [vmem:[#allocation10 + $0xc] sm:$0xf]
          %v1907 = vld [vmem:[#allocation10 + $0x10] sm:$0xf]
          %v1908 = vld [vmem:[#allocation10 + $0x14] sm:$0xf]
          %v1909 = vld [vmem:[#allocation10 + $0x18] sm:$0xf]
          %v1910 = vld [vmem:[#allocation10 + $0x1c] sm:$0xf]
          %v1911 = vld [vmem:[#allocation10 + $0x20] sm:$0xf]
          %v1912 = vld [vmem:[#allocation10 + $0x24] sm:$0xf]
          %v1913 = vld [vmem:[#allocation10 + $0x28] sm:$0xf]
          %v1914 = vld [vmem:[#allocation10 + $0x2c] sm:$0xf]
          %v1915 = vld [vmem:[#allocation10 + $0x30] sm:$0xf]
          %v1916 = vld [vmem:[#allocation10 + $0x34] sm:$0xf]
          %v1917 = vld [vmem:[#allocation10 + $0x38] sm:$0xf]
          %v1918 = vld [vmem:[#allocation10 + $0x3c] sm:$0xf]
          %v1919 = vld [vmem:[#allocation10 + $0x40] sm:$0xf]
          %v1920 = vld [vmem:[#allocation10 + $0x44] sm:$0xf]
          %v1921 = vld [vmem:[#allocation10 + $0x48] sm:$0xf]
          %v1922 = vld [vmem:[#allocation10 + $0x4c] sm:$0xf]
          %v1923 = vld [vmem:[#allocation10 + $0x50] sm:$0xf]
          %v1924 = vld [vmem:[#allocation10 + $0x54] sm:$0xf]
          %v1925 = vld [vmem:[#allocation10 + $0x58] sm:$0xf]
          %v1926 = vld [vmem:[#allocation10 + $0x5c] sm:$0xf]
          %v1927 = vld [vmem:[#allocation10 + $0x60] sm:$0xf]
          %v1928 = vld [vmem:[#allocation10 + $0x64] sm:$0xf]
          %v1929 = vld [vmem:[#allocation10 + $0x68] sm:$0xf]
          %v1930 = vld [vmem:[#allocation10 + $0x6c] sm:$0xf]
          %v1931 = vld [vmem:[#allocation10 + $0x70] sm:$0xf]
          %v1932 = vld [vmem:[#allocation10 + $0x74] sm:$0xf]
          %v1933 = vld [vmem:[#allocation10 + $0x78] sm:$0xf]
          %v1934 = vld [vmem:[#allocation10 + $0x7c] sm:$0xf]
          %v1967 = vunpack.c.l.b16 %v1903
          %v1968 = vunpack.c.l.b16 %v1904
          %v1969 = vunpack.c.l.b16 %v1905
          %v1970 = vunpack.c.l.b16 %v1906
          %v1971 = vunpack.c.l.b16 %v1907
          %v1972 = vunpack.c.l.b16 %v1908
          %v1973 = vunpack.c.l.b16 %v1909
          %v1974 = vunpack.c.l.b16 %v1910
          %v1975 = vunpack.c.l.b16 %v1911
          %v1976 = vunpack.c.l.b16 %v1912
          %v1977 = vunpack.c.l.b16 %v1913
          %v1978 = vunpack.c.l.b16 %v1914
          %v1979 = vunpack.c.l.b16 %v1915
          %v1980 = vunpack.c.l.b16 %v1916
          %v1981 = vunpack.c.l.b16 %v1917
          %v1982 = vunpack.c.l.b16 %v1918
          %v1983 = vunpack.c.l.b16 %v1919
          %v1984 = vunpack.c.l.b16 %v1920
          %v1985 = vunpack.c.l.b16 %v1921
          %v1986 = vunpack.c.l.b16 %v1922
          %v1987 = vunpack.c.l.b16 %v1923
          %v1988 = vunpack.c.l.b16 %v1924
          %v1989 = vunpack.c.l.b16 %v1925
          %v1990 = vunpack.c.l.b16 %v1926
          %v1991 = vunpack.c.l.b16 %v1927
          %v1992 = vunpack.c.l.b16 %v1928
          %v1993 = vunpack.c.l.b16 %v1929
          %v1994 = vunpack.c.l.b16 %v1930
          %v1995 = vunpack.c.l.b16 %v1931
          %v1996 = vunpack.c.l.b16 %v1932
          %v1997 = vunpack.c.l.b16 %v1933
          %v1998 = vunpack.c.l.b16 %v1934
          %v1999 = vpack.c.b16 %v1968, %v1967
          %v2000 = vpack.c.b16 %v1970, %v1969
          %v2001 = vpack.c.b16 %v1972, %v1971
          %v2002 = vpack.c.b16 %v1974, %v1973
          %v2003 = vpack.c.b16 %v1976, %v1975
          %v2004 = vpack.c.b16 %v1978, %v1977
          %v2005 = vpack.c.b16 %v1980, %v1979
          %v2006 = vpack.c.b16 %v1982, %v1981
          %v2007 = vpack.c.b16 %v1984, %v1983
          %v2008 = vpack.c.b16 %v1986, %v1985
          %v2009 = vpack.c.b16 %v1988, %v1987
          %v2010 = vpack.c.b16 %v1990, %v1989
          %v2011 = vpack.c.b16 %v1992, %v1991
          %v2012 = vpack.c.b16 %v1994, %v1993
          %v2013 = vpack.c.b16 %v1996, %v1995
          %v2014 = vpack.c.b16 %v1998, %v1997
          %2031 = vmatprep.subr.bf16.mxu0 0
          %2032 = vmatpush1.bf16.msra.mxu0 %v1999
          %2033 = vmatprep.subr.bf16.mxu0 0
          %2034 = vmatpush1.bf16.msra.mxu0 %v2000
          %2035 = vmatprep.subr.bf16.mxu0 0
          %2036 = vmatpush1.bf16.msra.mxu0 %v2001
          %2037 = vmatprep.subr.bf16.mxu0 0
          %2038 = vmatpush1.bf16.msra.mxu0 %v2002
          %2039 = vmatprep.subr.bf16.mxu0 0
          %2040 = vmatpush1.bf16.msra.mxu0 %v2003
          %2041 = vmatprep.subr.bf16.mxu0 0
          %2042 = vmatpush1.bf16.msra.mxu0 %v2004
          %2043 = vmatprep.subr.bf16.mxu0 0
          %2044 = vmatpush1.bf16.msra.mxu0 %v2005
          %2045 = vmatprep.subr.bf16.mxu0 0
          %2046 = vmatpush1.bf16.msra.mxu0 %v2006
          %2047 = vmatprep.subr.bf16.mxu0 0
          %2048 = vmatpush1.bf16.msra.mxu0 %v2007
          %2049 = vmatprep.subr.bf16.mxu0 0
          %2050 = vmatpush1.bf16.msra.mxu0 %v2008
          %2051 = vmatprep.subr.bf16.mxu0 0
          %2052 = vmatpush1.bf16.msra.mxu0 %v2009
          %2053 = vmatprep.subr.bf16.mxu0 0
          %2054 = vmatpush1.bf16.msra.mxu0 %v2010
          %2055 = vmatprep.subr.bf16.mxu0 0
          %2056 = vmatpush1.bf16.msra.mxu0 %v2011
          %2057 = vmatprep.subr.bf16.mxu0 0
          %2058 = vmatpush1.bf16.msra.mxu0 %v2012
          %2059 = vmatprep.subr.bf16.mxu0 0
          %2060 = vmatpush1.bf16.msra.mxu0 %v2013
          %2061 = vmatprep.subr.bf16.mxu0 0
          %2062 = vmatpush1.bf16.msra.mxu0 %v2014
          %2063 = vmatprep.mubr.bf16.mxu0 %v1902
          %2064 = vmatmul.mubr.bf16.gmra.mrb[0].mxu0 %v1901
          %v2065 = vpop.f32.mrb[0].mxu0
          %v2066 = vadd.f32 0.0, %v2065
          %v2067 = vpop.f32.mrb[0].mxu0
          %v2068 = vpop.f32.mrb[0].mxu0
          %v2069 = vadd.f32 0.0, %v2068
          %v2070 = vpop.f32.mrb[0].mxu0
          %2071 = vdwg.mxu0
          %v2072 = vpack.c.bf16 %v2069, %v2066
          %s2073 = sshra.s32 %s503, 4
          %s2074 = sand.u32 %s503, 15
          %s2075 = smul.addr %s2073, 8
          %s2076 = scalar_lea.vmem [#allocation3], %s2075
          %2077 = vst [vmem:[%s2076] sm:$0xff] %v2072
        $region84: #{tpu_custom_call.1} parent=59 // pred_fallthru
          _
        %p2078 = scmp.eq.s32.totalorder %s37, 2
        // Predicated region
        $region85: #{tpu_custom_call.1} parent=59 // pred_check
          %p2079 = pneg %p2078
        $region86: #{tpu_custom_call.1} parent=59 // pred_check_branch
          %2081 = sbr.rel (%p2079) target = $region88
        $region87: #{tpu_custom_call.1} parent=59 // pred_region
          %v2082 = vld [vmem:[%s443] sm:$0xf]
          %v2083 = vld [vmem:[%s443 + $0x4] sm:$0xf]
          %v2084 = vld [vmem:[#allocation3] sm:$0xff]
          %v2085 = vld [vmem:[%s7] sm:$0x1]
          %v2087 = vlaneseq
          %v2088 = vshrl.u32 %v2087, 7
          %v2089 = vsub.s32 0, %v2088
          %v2090 = vrot.slane %v2085, %v2089
          %v2094 = vunpack.c.l.b16 %v2082
          %v2095 = vunpack.c.l.b16 %v2083
          %v2096 = vpack.c.b16 %v2095, %v2094
          %vm2097 = vcmask 130048
          %v2099 = vsel %vm2097, %v2096, 0
          %2101 = vmatprep.subr.bf16.mxu0 0
          %2102 = vmatpush1.bf16.msra.mxu0 %v2084
          %2103 = vmatprep.subr.bf16.mxu0 0
          %2104 = vmatpush1.bf16.msra.mxu0 0
          %2105 = vmatprep.subr.bf16.mxu0 0
          %2106 = vmatpush1.bf16.msra.mxu0 0
          %2107 = vmatprep.subr.bf16.mxu0 0
          %2108 = vmatpush1.bf16.msra.mxu0 0
          %2109 = vmatprep.subr.bf16.mxu0 0
          %2110 = vmatpush1.bf16.msra.mxu0 0
          %2111 = vmatprep.subr.bf16.mxu0 0
          %2112 = vmatpush1.bf16.msra.mxu0 0
          %2113 = vmatprep.subr.bf16.mxu0 0
          %2114 = vmatpush1.bf16.msra.mxu0 0
          %2115 = vmatprep.subr.bf16.mxu0 0
          %2116 = vmatpush1.bf16.msra.mxu0 0
          %2117 = vmatprep.subr.bf16.mxu0 0
          %2118 = vmatpush1.bf16.msra.mxu0 0
          %2119 = vmatprep.subr.bf16.mxu0 0
          %2120 = vmatpush1.bf16.msra.mxu0 0
          %2121 = vmatprep.subr.bf16.mxu0 0
          %2122 = vmatpush1.bf16.msra.mxu0 0
          %2123 = vmatprep.subr.bf16.mxu0 0
          %2124 = vmatpush1.bf16.msra.mxu0 0
          %2125 = vmatprep.subr.bf16.mxu0 0
          %2126 = vmatpush1.bf16.msra.mxu0 0
          %2127 = vmatprep.subr.bf16.mxu0 0
          %2128 = vmatpush1.bf16.msra.mxu0 0
          %2129 = vmatprep.subr.bf16.mxu0 0
          %2130 = vmatpush1.bf16.msra.mxu0 0
          %2131 = vmatprep.subr.bf16.mxu0 0
          %2132 = vmatpush1.bf16.msra.mxu0 0
          %2133 = vmatprep.mubr.bf16.mxu0 0
          %2134 = vmatmul.mubr.bf16.gmra.mrb[0].mxu0 %v2099
          %v2135 = vpop.f32.mrb[0].mxu0
          %v2136 = vadd.f32 %v2090, %v2135
          %v2137 = vpop.f32.mrb[0].mxu0
          %v2138 = vpop.f32.mrb[0].mxu0
          %v2139 = vadd.f32 %v2090, %v2138
          %v2140 = vpop.f32.mrb[0].mxu0
          %2141 = vdwg.mxu0
          %v2142 = vlaneseq
          %v2143 = vand.u32 %v2142, 127
          %vm2144 = vcmp.lt.s32.totalorder %v2143, 64
          %2145 = vadd.xlane.f32.xlu0 %v2136
          %v2146 = vpop.xlane.xlu0 %2145
          %2147 = vadd.xlane.f32.xlu0 %v2139
          %v2148 = vpop.xlane.xlu0 %2147
          %v2149 = vmul.f32 %v2146, 0.015625
          %v2150 = vmul.f32 %v2148, 0.015625
          %v2151 = vsub.f32 %v2136, %v2149
          %v2152 = vsub.f32 %v2139, %v2150
          %v2153 = vsel %vm2144, %v2151, 0.0
          %v2154 = vsel %vm2144, %v2152, 0.0
          %v2155 = vmul.f32 %v2153, %v2153
          %v2156 = vmul.f32 %v2154, %v2154
          %2157 = vadd.xlane.f32.xlu0 %v2155
          %v2158 = vpop.xlane.xlu0 %2157
          %2159 = vadd.xlane.f32.xlu0 %v2156
          %v2160 = vpop.xlane.xlu0 %2159
          %v2161 = vmul.f32 %v2158, 0.015625
          %v2162 = vmul.f32 %v2160, 0.015625
          %v2163 = vadd.f32 %v2161, 1e-05
          %v2164 = vadd.f32 %v2162, 1e-05
          %v2165 = vrsqrt.pop %v2163
          %v2166 = vrsqrt.pop %v2164
          %v2167 = vmul.f32 %v2151, %v2165
          %v2168 = vmul.f32 %v2152, %v2166
          %v2169 = vld [vmem:[%s8] sm:$0x1]
          %v2171 = vlaneseq
          %v2172 = vshrl.u32 %v2171, 7
          %v2173 = vsub.s32 0, %v2172
          %v2174 = vrot.slane %v2169, %v2173
          %v2176 = vmul.f32 %v2167, %v2174
          %v2177 = vmul.f32 %v2168, %v2174
          %v2178 = vld [vmem:[%s9] sm:$0x1]
          %v2180 = vlaneseq
          %v2181 = vshrl.u32 %v2180, 7
          %v2182 = vsub.s32 0, %v2181
          %v2183 = vrot.slane %v2178, %v2182
          %v2185 = vadd.f32 %v2176, %v2183
          %v2186 = vadd.f32 %v2177, %v2183
          %vm2187 = vcmp.ge.f32.partialorder %v2185, 0.0
          %vm2188 = vcmp.ge.f32.partialorder %v2186, 0.0
          %v2189 = vmul.f32 %v2185, 0.2
          %v2190 = vmul.f32 %v2186, 0.2
          %v2191 = vsel %vm2187, %v2185, %v2189
          %v2192 = vsel %vm2188, %v2186, %v2190
          %v2193 = vpack.c.bf16 %v2192, %v2191
          %v2195 = vunpack.c.l.b16 %v2193
          %v2196 = vunpack.c.h.b16 %v2193
          %v2197 = vpack.c.b16 %v2195, %v2195
          %v2198 = vpack.c.b16 %v2196, %v2196
          %2201 = vst [vmem:[%s492] sm:$0xf] %v2197
          %2202 = vst [vmem:[%s492 + $0x4] sm:$0xf] %v2198
        $region88: #{tpu_custom_call.1} parent=59 // pred_fallthru
          _
        %s2203 = sand.u32 %s296, 1
        %s2204 = scalar_lea.sflag [#allocation6], %s2203
        %s2205 = sand.u32 %s296, 1
        %s2206 = smul.addr %s2205, 8
        %s2207 = scalar_lea.vmem [#allocation12], %s2206
        // Predicated region
        $region89: #{tpu_custom_call.1} parent=59 // pred_check
          %p2208 = pneg %p306
        $region90: #{tpu_custom_call.1} parent=59 // pred_check_branch
          %2210 = sbr.rel (%p2208) target = $region92
        $region91: #{tpu_custom_call.1} parent=59 // pred_region
          %p2211 = scmp.eq.s32.totalorder %s37, 2
          %s2212 = scalar_select %p2211, %s38, 0
          %s2213 = smul.u32 2, %s2212
          %s2215 = ssub.s32 128, 128
          %2216 = vsyncadd %s2204, %s2215
          %s2217 = smul.addr %s36, 2
          %s2218 = sadd.s32 %s2213, %s2217
          %s2219 = smul.addr %s2218, 64
          %s2220 = scalar_lea.hbm %s10, %s2219
          %s2221 = sshll.u32 %s2207, 4
          %s2222 = int_to_ptr.vmem [resolvable:$true] %s2221
          %2227 = dma.vmem_to_hbm [thread:$0]  %s2222, 128, %s2220, %s2204, 64, 64, 4
        $region92: #{tpu_custom_call.1} parent=59 // pred_fallthru
          _
      $region60: #{tpu_custom_call.1} parent=5 // pred_fallthru
        _
      %p2228 = scmp.le.s32.totalorder 2, %s26
      // Predicated region
      $region93: #{tpu_custom_call.1} parent=5 // pred_check
        %p2229 = pneg %p2228
      $region94: #{tpu_custom_call.1} parent=5 // pred_check_branch
        %2231 = sbr.rel (%p2229) target = $region96
      $region95: #{tpu_custom_call.1} parent=5 // pred_region
        %s2232 = ssub.s32 %s26, 2
        // Predicated region
        $region97: #{tpu_custom_call.1} parent=95 // pred_check
          %p2233 = pneg %p312
        $region98: #{tpu_custom_call.1} parent=95 // pred_check_branch
          %2235 = sbr.rel (%p2233) target = $region100
        $region99: #{tpu_custom_call.1} parent=95 // pred_region
          %s2236 = sand.u32 %s297, 1
          %s2237 = scalar_lea.sflag [#allocation6], %s2236
          %s2238 = sand.u32 %s297, 1
          %s2239 = smul.addr %s2238, 8
          %s2240 = scalar_lea.vmem [#allocation12], %s2239
          %2241 = dma.done %s2237, 128
        $region100: #{tpu_custom_call.1} parent=95 // pred_fallthru
          _
      $region96: #{tpu_custom_call.1} parent=5 // pred_fallthru
        _
    $region6: #{tpu_custom_call.1} parent=1 // loop_footer
      %s30 = sadd.s32 1, %s26
    $region7: #{tpu_custom_call.1} parent=1 // loop_footer_branch
      %25 = sbr.rel target = $region3
    $region8: #{tpu_custom_call.1} parent=1 // loop_exit
      _
    %2242 = vsyncpa [#allocation5], 1
    %s2243 = scalar_lea.sflag [#allocation5], 1
    %2244 = vsyncpa %s2243, 1
    %2245 = vsyncpa [#allocation8], 1
    %s2246 = scalar_lea.sflag [#allocation8], 1
    %2247 = vsyncpa %s2246, 1
    %2248 = vsyncpa [#allocation11], 1
    %2249 = vsyncpa [#allocation6], 1
    %s2250 = scalar_lea.sflag [#allocation6], 1
    %2251 = vsyncpa %s2250, 1

</llo_original>
